<compile_context>
chip_gen: v5e
topology: v5e:2x2
jax: 0.10.0
libtpu: 0.0.40
codegen_flags: <defaults>
</compile_context>

<pallas_src>
import math
import functools

import jax
import jax.numpy as jnp
from jax.experimental import pallas as pl
from jax.experimental.pallas import tpu as pltpu

# ----------------------------- config (small) --------------------------------
VOCAB = 64
MAX_POS = 16
TYPE_VOCAB = 2
HIDDEN = 32
N_HEADS = 2
HEAD_DIM = HIDDEN // N_HEADS
FFN = 64
N_LAYERS = 2
NUM_LABELS = 2
LN_EPS = 1e-12

BATCH = 2
SEQ = 8
M = BATCH * SEQ
LANE = 128

# ---- weight slab (bf16) row layout: every section starts on a 16-row boundary
R_WORD = 0
R_POS = R_WORD + VOCAB                              # 64
R_TYPE = R_POS + MAX_POS                            # 80
R_WHID0 = -(-(R_TYPE + TYPE_VOCAB) // 16) * 16      # 96  (per layer: +HIDDEN rows)
R_WF2_0 = R_WHID0 + N_LAYERS * HIDDEN               # 160 (per layer: +FFN rows)
R_WCLS = R_WF2_0 + N_LAYERS * FFN                   # 288
WT_ROWS = R_WCLS + HIDDEN                           # 320
WT_COLS = 4 * HIDDEN + FFN                          # 192: [wqkv 0:96 | wo 96:128 | wf1 128:192]

# ---- vector slab (f32) row layout: one bias / gamma / beta vector per row
V_EMB_G = 0
V_EMB_B = 1
V_LAYER0 = 2           # per layer 8 rows: bqkv, bo, ln1g, ln1b, bf1, bf2, ln2g, ln2b
V_BP = V_LAYER0 + 8 * N_LAYERS                      # 18
V_BC = V_BP + 1                                     # 19
VEC_ROWS = V_BC + 1                                 # 20

# ---- int slab (int32) column layout
MASK_COL = 8
INT_COLS = MASK_COL + SEQ                           # 16

_VMEM = functools.partial(pl.BlockSpec, memory_space=pltpu.MemorySpace.VMEM)
_SMEM = functools.partial(pl.BlockSpec, memory_space=pltpu.MemorySpace.SMEM)


# ------------------------------- kernel ---------------------------------------
def _layer_norm(x, gamma, beta):
    mu = jnp.mean(x, axis=-1, keepdims=True)
    var = jnp.mean(jnp.square(x - mu), axis=-1, keepdims=True)
    return (x - mu) * jax.lax.rsqrt(var + LN_EPS) * gamma + beta


def fused_forward_kernel(int_ref, vec_ref, wt_ref, logits_ref, loss_ref):
    f32 = jnp.float32
    bf16 = jnp.bfloat16

    def vrow(r, n=HIDDEN):
        return vec_ref[r:r + 1, :n]                              # (1, n) f32

    ids = int_ref[:, 0:1]                                        # (M, 1) int32
    tt = int_ref[:, 1:2].astype(f32)                             # (M, 1)
    labels = int_ref[0:BATCH, 2:3]                               # (B, 1) int32
    msk = int_ref[0:BATCH, MASK_COL:MASK_COL + SEQ].astype(f32)  # (B, S)

    # -------------------- embeddings (gather as one-hot matmul) --------------
    vocab_iota = jax.lax.broadcasted_iota(jnp.int32, (M, VOCAB), 1)
    onehot_ids = (vocab_iota == ids).astype(bf16)
    word = jnp.dot(onehot_ids, wt_ref[R_WORD:R_WORD + VOCAB, 0:HIDDEN],
                   preferred_element_type=f32)                   # (M, H)
    pos = jnp.tile(wt_ref[R_POS:R_POS + SEQ, 0:HIDDEN].astype(f32), (BATCH, 1))
    t0 = wt_ref[R_TYPE:R_TYPE + 1, 0:HIDDEN].astype(f32)
    t1 = wt_ref[R_TYPE + 1:R_TYPE + 2, 0:HIDDEN].astype(f32)
    typ = (1.0 - tt) * t0 + tt * t1
    x = _layer_norm(word + pos + typ, vrow(V_EMB_G), vrow(V_EMB_B))  # (M, H) f32

    # additive attention mask for the merged (head*batch) axis, built ONCE
    neg_bs = (1.0 - msk) * (-1e9)                                # (B, S)
    neg_g = jnp.tile(neg_bs, (N_HEADS, 1))[:, None, :]           # (G, 1, S)

    scale = 1.0 / math.sqrt(HEAD_DIM)
    for li in range(N_LAYERS):                                   # static unroll
        r_w = R_WHID0 + li * HIDDEN
        wl = wt_ref[r_w:r_w + HIDDEN, :]                         # (H, 192) bf16
        vb = V_LAYER0 + 8 * li

        # fused QKV projection: one (M,H) x (H,3H) bf16 MXU matmul
        qkv = (jnp.dot(x.astype(bf16), wl[:, 0:3 * HIDDEN],
                       preferred_element_type=f32)
               + vrow(vb + 0, 3 * HIDDEN))                       # (M, 3H) f32

        # merge (head, batch) into one leading axis -> single batched einsums
        def heads(base):
            return jnp.concatenate(
                [qkv[:, base + h * HEAD_DIM: base + (h + 1) * HEAD_DIM]
                 .reshape(BATCH, SEQ, HEAD_DIM) for h in range(N_HEADS)],
                axis=0).astype(bf16)                             # (G, S, HD)

        q = heads(0)
        k = heads(HIDDEN)
        v = heads(2 * HIDDEN)

        s = jnp.einsum('gqd,gkd->gqk', q, k,
                       preferred_element_type=f32) * scale + neg_g   # (G, S, S)
        s = s - jnp.max(s, axis=-1, keepdims=True)
        p = jnp.exp(s)
        p = p / jnp.sum(p, axis=-1, keepdims=True)               # exact softmax norm
        ctx = jnp.einsum('gqk,gkd->gqd', p.astype(bf16), v,
                         preferred_element_type=f32)             # (G, S, HD)

        # fold per-head row-slices of W_o (no lane concat of head contexts)
        attn = vrow(vb + 1)                                      # bo, (1, H)
        wo = wl[:, 3 * HIDDEN:4 * HIDDEN]                        # (H, H) bf16
        for h in range(N_HEADS):
            ctx_h = ctx[h * BATCH:(h + 1) * BATCH].reshape(M, HEAD_DIM)
            attn = attn + jnp.dot(ctx_h.astype(bf16),
                                  wo[h * HEAD_DIM:(h + 1) * HEAD_DIM, :],
                                  preferred_element_type=f32)
        h1 = _layer_norm(x + attn, vrow(vb + 2), vrow(vb + 3))

        ff = (jnp.dot(h1.astype(bf16), wl[:, 4 * HIDDEN:],
                      preferred_element_type=f32) + vrow(vb + 4, FFN))
        # TODO(synk): HF BERT uses exact (erf) GELU; tanh approximation used here.
        ff = jax.nn.gelu(ff, approximate=True)
        r_f2 = R_WF2_0 + li * FFN
        ff = (jnp.dot(ff.astype(bf16), wt_ref[r_f2:r_f2 + FFN, 0:HIDDEN],
                      preferred_element_type=f32) + vrow(vb + 5))
        x = _layer_norm(h1 + ff, vrow(vb + 6), vrow(vb + 7))

    # -------------- [CLS] row -> pooler -> classifier -> CE loss -------------
    h_cls = x.reshape(BATCH, SEQ, HIDDEN)[:, 0, :]               # (B, H) f32
    wcls = wt_ref[R_WCLS:R_WCLS + HIDDEN, :]                     # (H, 192) bf16
    pooled = jnp.tanh(jnp.dot(h_cls.astype(bf16), wcls[:, LANE:LANE + HIDDEN],
                              preferred_element_type=f32) + vrow(V_BP))
    # classifier weight is zero-padded to 128 lanes -> lane-dense logits block
    logits_pad = (jnp.dot(pooled.astype(bf16), wcls[:, 0:LANE],
                          preferred_element_type=f32)
                  + vec_ref[V_BC:V_BC + 1, :])                   # (B, 128)
    logits_ref[...] = logits_pad

    # mean cross-entropy (matches torch.nn.CrossEntropyLoss on logits)
    col = jax.lax.broadcasted_iota(jnp.int32, (BATCH, LANE), 1)
    onehot = (col == labels).astype(f32)                         # (B, 128)
    zl = logits_pad + jnp.where(col < NUM_LABELS, 0.0, -1e30)    # mask padding
    m = jnp.max(zl, axis=-1, keepdims=True)
    lse = m + jnp.log(jnp.sum(jnp.exp(zl - m), axis=-1, keepdims=True))
    picked = jnp.sum(onehot * logits_pad, axis=-1, keepdims=True)
    loss_ref[0, 0] = jnp.mean(lse - picked)                      # scalar -> SMEM


# ----------------------------- pallas wrapper ----------------------------------
def monotransquest_forward(params, input_ids, attention_mask, token_type_ids, labels):
    # pack all integer inputs + the mask into ONE int32 slab (single DMA)
    int_in = jnp.zeros((M, INT_COLS), jnp.int32)
    int_in = int_in.at[:, 0].set(input_ids.astype(jnp.int32).reshape(-1))
    int_in = int_in.at[:, 1].set(token_type_ids.astype(jnp.int32).reshape(-1))
    int_in = int_in.at[:BATCH, 2].set(labels.astype(jnp.int32))
    int_in = int_in.at[:BATCH, MASK_COL:MASK_COL + SEQ].set(
        attention_mask.astype(jnp.int32))

    logits_pad, loss = pl.pallas_call(
        fused_forward_kernel,
        out_shape=(jax.ShapeDtypeStruct((BATCH, LANE), jnp.float32),
                   jax.ShapeDtypeStruct((1, 1), jnp.float32)),
        in_specs=[_VMEM(), _VMEM(), _VMEM()],
        out_specs=(_VMEM(), _SMEM()),
    )(int_in, params['vec'], params['wt'])

    return loss[0, 0], logits_pad[:, :NUM_LABELS]                # (scalar, (B, 2))


# ----------------------------- parameter init ---------------------------------
def init_params(key):
    keys = jax.random.split(key, 5 + N_LAYERS)

    def nrm(k, shape):
        return 0.02 * jax.random.normal(k, shape, jnp.float32)

    wt = jnp.zeros((WT_ROWS, WT_COLS), jnp.float32)
    vec = jnp.zeros((VEC_ROWS, LANE), jnp.float32)

    # embeddings + embedding LayerNorm
    wt = wt.at[R_WORD:R_WORD + VOCAB, :HIDDEN].set(nrm(keys[0], (VOCAB, HIDDEN)))
    wt = wt.at[R_POS:R_POS + MAX_POS, :HIDDEN].set(nrm(keys[1], (MAX_POS, HIDDEN)))
    wt = wt.at[R_TYPE:R_TYPE + TYPE_VOCAB, :HIDDEN].set(
        nrm(keys[2], (TYPE_VOCAB, HIDDEN)))
    vec = vec.at[V_EMB_G, :HIDDEN].set(1.0)                      # gamma=1, beta=0

    # encoder layers
    for li in range(N_LAYERS):
        lk = jax.random.split(keys[3 + li], 6)
        wq = nrm(lk[0], (HIDDEN, HIDDEN))
        wk = nrm(lk[1], (HIDDEN, HIDDEN))
        wv = nrm(lk[2], (HIDDEN, HIDDEN))
        wo = nrm(lk[3], (HIDDEN, HIDDEN))
        wf1 = nrm(lk[4], (HIDDEN, FFN))
        wf2 = nrm(lk[5], (FFN, HIDDEN))
        r = R_WHID0 + li * HIDDEN
        wt = wt.at[r:r + HIDDEN, 0:3 * HIDDEN].set(
            jnp.concatenate([wq, wk, wv], axis=1))               # fused QKV
        wt = wt.at[r:r + HIDDEN, 3 * HIDDEN:4 * HIDDEN].set(wo)
        wt = wt.at[r:r + HIDDEN, 4 * HIDDEN:].set(wf1)
        r2 = R_WF2_0 + li * FFN
        wt = wt.at[r2:r2 + FFN, 0:HIDDEN].set(wf2)
        vb = V_LAYER0 + 8 * li
        vec = vec.at[vb + 2, :HIDDEN].set(1.0)                   # ln1 gamma
        vec = vec.at[vb + 6, :HIDDEN].set(1.0)                   # ln2 gamma
        # all dense biases and LN betas are zero-initialized (rows stay 0)

    # pooler + classifier (classifier weight zero-padded to 128 output lanes)
    wp = nrm(keys[3 + N_LAYERS], (HIDDEN, HIDDEN))
    wc = nrm(keys[4 + N_LAYERS], (HIDDEN, NUM_LABELS))
    wt = wt.at[R_WCLS:R_WCLS + HIDDEN, 0:NUM_LABELS].set(wc)     # cols [0,128) = wc_pad
    wt = wt.at[R_WCLS:R_WCLS + HIDDEN, LANE:LANE + HIDDEN].set(wp)

    return {'wt': wt.astype(jnp.bfloat16), 'vec': vec}


# --------------------------------- main ----------------------------------------
if __name__ == "__main__":
    key = jax.random.PRNGKey(0)
    k_par, k_ids, k_lab = jax.random.split(key, 3)

    params = init_params(k_par)

    input_ids = jax.random.randint(k_ids, (BATCH, SEQ), 0, VOCAB, dtype=jnp.int32)
    attention_mask = jnp.ones((BATCH, SEQ), jnp.int32).at[1, SEQ - 2:].set(0)
    token_type_ids = jnp.zeros((BATCH, SEQ), jnp.int32)
    labels = jax.random.randint(k_lab, (BATCH,), 0, NUM_LABELS, dtype=jnp.int32)

    loss, logits = monotransquest_forward(
        params, input_ids, attention_mask, token_type_ids, labels)
    jax.block_until_ready((loss, logits))

    assert logits.shape == (BATCH, NUM_LABELS)
    assert loss.shape == ()
    assert bool(jnp.isfinite(loss)) and bool(jnp.all(jnp.isfinite(logits)))
    print("KERNEL_OK")
</pallas_src>

<mosaic_0001>
module attributes {stable_mosaic.version = 11 : i64} {
  func.func @fused_forward_kernel(%arg0: memref<16x16xi32, #tpu.memory_space<vmem>>, %arg1: memref<20x128xf32, #tpu.memory_space<vmem>>, %arg2: memref<320x192xbf16, #tpu.memory_space<vmem>>, %arg3: memref<2x128xf32, #tpu.memory_space<vmem>>, %arg4: memref<1x1xf32, #tpu.memory_space<smem>>) attributes {dimension_semantics = [], scalar_prefetch = 0 : i64, scratch_operands = 0 : i64, tpu.core_type = #tpu.core_type<tc>} {
    %c0 = arith.constant 0 : index
    %c0_0 = arith.constant 0 : index
    %0 = vector.load %arg0[%c0, %c0_0] : memref<16x16xi32, #tpu.memory_space<vmem>>, vector<16x1xi32>
    %c0_1 = arith.constant 0 : index
    %c1 = arith.constant 1 : index
    %1 = vector.load %arg0[%c0_1, %c1] : memref<16x16xi32, #tpu.memory_space<vmem>>, vector<16x1xi32>
    %2 = arith.sitofp %1 : vector<16x1xi32> to vector<16x1xf32>
    %c0_2 = arith.constant 0 : index
    %c2 = arith.constant 2 : index
    %3 = vector.load %arg0[%c0_2, %c2] : memref<16x16xi32, #tpu.memory_space<vmem>>, vector<2x1xi32>
    %c0_3 = arith.constant 0 : index
    %c8 = arith.constant 8 : index
    %4 = vector.load %arg0[%c0_3, %c8] : memref<16x16xi32, #tpu.memory_space<vmem>>, vector<2x8xi32>
    %5 = arith.sitofp %4 : vector<2x8xi32> to vector<2x8xf32>
    %6 = tpu.iota {dimensions = array<i32: 1>} : vector<16x64xi32>
    %7 = vector.broadcast %0 : vector<16x1xi32> to vector<16x64xi32>
    %8 = arith.cmpi eq, %6, %7 : vector<16x64xi32>
    %9 = arith.extui %8 : vector<16x64xi1> to vector<16x64xi32>
    %10 = arith.sitofp %9 : vector<16x64xi32> to vector<16x64xf32>
    %11 = arith.truncf %10 : vector<16x64xf32> to vector<16x64xbf16>
    %c0_4 = arith.constant 0 : index
    %c0_5 = arith.constant 0 : index
    %12 = vector.load %arg2[%c0_4, %c0_5] : memref<320x192xbf16, #tpu.memory_space<vmem>>, vector<64x32xbf16>
    %cst = arith.constant dense<0.000000e+00> : vector<16x32xf32>
    %13 = tpu.matmul %11, %12, %cst {dimension_numbers = #tpu.dot_dimension_numbers<[1], [0], [0], [1], [0, 0, 1, 1], [], []>} : vector<16x64xbf16>, vector<64x32xbf16>, vector<16x32xf32> -> vector<16x32xf32>
    %c64 = arith.constant 64 : index
    %c0_6 = arith.constant 0 : index
    %14 = vector.load %arg2[%c64, %c0_6] : memref<320x192xbf16, #tpu.memory_space<vmem>>, vector<8x32xbf16>
    %15 = arith.extf %14 : vector<8x32xbf16> to vector<8x32xf32>
    %16 = tpu.concatenate %15, %15 in 0 : vector<8x32xf32>, vector<8x32xf32> -> vector<16x32xf32>
    %c80 = arith.constant 80 : index
    %c0_7 = arith.constant 0 : index
    %17 = vector.load %arg2[%c80, %c0_7] : memref<320x192xbf16, #tpu.memory_space<vmem>>, vector<1x32xbf16>
    %18 = arith.extf %17 : vector<1x32xbf16> to vector<1x32xf32>
    %c81 = arith.constant 81 : index
    %c0_8 = arith.constant 0 : index
    %19 = vector.load %arg2[%c81, %c0_8] : memref<320x192xbf16, #tpu.memory_space<vmem>>, vector<1x32xbf16>
    %20 = arith.extf %19 : vector<1x32xbf16> to vector<1x32xf32>
    %cst_9 = arith.constant 1.000000e+00 : f32
    %21 = vector.broadcast %cst_9 : f32 to vector<16x1xf32>
    %22 = arith.subf %21, %2 : vector<16x1xf32>
    %23 = vector.broadcast %22 : vector<16x1xf32> to vector<16x32xf32>
    %24 = vector.broadcast %18 : vector<1x32xf32> to vector<16x32xf32>
    %25 = arith.mulf %23, %24 : vector<16x32xf32>
    %26 = vector.broadcast %2 : vector<16x1xf32> to vector<16x32xf32>
    %27 = vector.broadcast %20 : vector<1x32xf32> to vector<16x32xf32>
    %28 = arith.mulf %26, %27 : vector<16x32xf32>
    %29 = arith.addf %25, %28 : vector<16x32xf32>
    %30 = arith.addf %13, %16 : vector<16x32xf32>
    %31 = arith.addf %30, %29 : vector<16x32xf32>
    %c0_10 = arith.constant 0 : index
    %c0_11 = arith.constant 0 : index
    %32 = vector.load %arg1[%c0_10, %c0_11] : memref<20x128xf32, #tpu.memory_space<vmem>>, vector<1x32xf32>
    %c1_12 = arith.constant 1 : index
    %c0_13 = arith.constant 0 : index
    %33 = vector.load %arg1[%c1_12, %c0_13] : memref<20x128xf32, #tpu.memory_space<vmem>>, vector<1x32xf32>
    %cst_14 = arith.constant dense<0.000000e+00> : vector<16xf32>
    %34 = vector.multi_reduction <add>, %31, %cst_14 [1] : vector<16x32xf32> to vector<16xf32>
    %35 = vector.shape_cast %34 : vector<16xf32> to vector<16x1xf32>
    %cst_15 = arith.constant 3.200000e+01 : f32
    %36 = vector.broadcast %cst_15 : f32 to vector<16x1xf32>
    %37 = arith.divf %35, %36 : vector<16x1xf32>
    %38 = vector.broadcast %37 : vector<16x1xf32> to vector<16x32xf32>
    %39 = arith.subf %31, %38 : vector<16x32xf32>
    %40 = arith.mulf %39, %39 : vector<16x32xf32>
    %cst_16 = arith.constant dense<0.000000e+00> : vector<16xf32>
    %41 = vector.multi_reduction <add>, %40, %cst_16 [1] : vector<16x32xf32> to vector<16xf32>
    %42 = vector.shape_cast %41 : vector<16xf32> to vector<16x1xf32>
    %cst_17 = arith.constant 3.200000e+01 : f32
    %43 = vector.broadcast %cst_17 : f32 to vector<16x1xf32>
    %44 = arith.divf %42, %43 : vector<16x1xf32>
    %45 = vector.broadcast %37 : vector<16x1xf32> to vector<16x32xf32>
    %46 = arith.subf %31, %45 : vector<16x32xf32>
    %cst_18 = arith.constant 9.99999996E-13 : f32
    %47 = vector.broadcast %cst_18 : f32 to vector<16x1xf32>
    %48 = arith.addf %44, %47 : vector<16x1xf32>
    %49 = math.rsqrt %48 : vector<16x1xf32>
    %50 = vector.broadcast %49 : vector<16x1xf32> to vector<16x32xf32>
    %51 = arith.mulf %46, %50 : vector<16x32xf32>
    %52 = vector.broadcast %32 : vector<1x32xf32> to vector<16x32xf32>
    %53 = arith.mulf %51, %52 : vector<16x32xf32>
    %54 = vector.broadcast %33 : vector<1x32xf32> to vector<16x32xf32>
    %55 = arith.addf %53, %54 : vector<16x32xf32>
    %cst_19 = arith.constant 1.000000e+00 : f32
    %56 = vector.broadcast %cst_19 : f32 to vector<2x8xf32>
    %57 = arith.subf %56, %5 : vector<2x8xf32>
    %cst_20 = arith.constant -1.000000e+09 : f32
    %58 = vector.broadcast %cst_20 : f32 to vector<2x8xf32>
    %59 = arith.mulf %57, %58 : vector<2x8xf32>
    %60 = tpu.concatenate %59, %59 in 0 : vector<2x8xf32>, vector<2x8xf32> -> vector<4x8xf32>
    %61 = vector.shape_cast %60 : vector<4x8xf32> to vector<4x1x8xf32>
    %c96 = arith.constant 96 : index
    %c0_21 = arith.constant 0 : index
    %62 = vector.load %arg2[%c96, %c0_21] : memref<320x192xbf16, #tpu.memory_space<vmem>>, vector<32x192xbf16>
    %63 = arith.truncf %55 : vector<16x32xf32> to vector<16x32xbf16>
    %64 = vector.extract_strided_slice %62 {offsets = [0, 0], sizes = [32, 96], strides = [1, 1]} : vector<32x192xbf16> to vector<32x96xbf16>
    %cst_22 = arith.constant dense<0.000000e+00> : vector<16x96xf32>
    %65 = tpu.matmul %63, %64, %cst_22 {dimension_numbers = #tpu.dot_dimension_numbers<[1], [0], [0], [1], [0, 0, 1, 1], [], []>} : vector<16x32xbf16>, vector<32x96xbf16>, vector<16x96xf32> -> vector<16x96xf32>
    %c2_23 = arith.constant 2 : index
    %c0_24 = arith.constant 0 : index
    %66 = vector.load %arg1[%c2_23, %c0_24] : memref<20x128xf32, #tpu.memory_space<vmem>>, vector<1x96xf32>
    %67 = vector.broadcast %66 : vector<1x96xf32> to vector<16x96xf32>
    %68 = arith.addf %65, %67 : vector<16x96xf32>
    %69 = vector.extract_strided_slice %68 {offsets = [0, 0], sizes = [16, 16], strides = [1, 1]} : vector<16x96xf32> to vector<16x16xf32>
    %70 = vector.shape_cast %69 : vector<16x16xf32> to vector<2x8x16xf32>
    %71 = vector.extract_strided_slice %68 {offsets = [0, 16], sizes = [16, 16], strides = [1, 1]} : vector<16x96xf32> to vector<16x16xf32>
    %72 = vector.shape_cast %71 : vector<16x16xf32> to vector<2x8x16xf32>
    %73 = tpu.concatenate %70, %72 in 0 : vector<2x8x16xf32>, vector<2x8x16xf32> -> vector<4x8x16xf32>
    %74 = arith.truncf %73 : vector<4x8x16xf32> to vector<4x8x16xbf16>
    %75 = vector.extract_strided_slice %68 {offsets = [0, 32], sizes = [16, 16], strides = [1, 1]} : vector<16x96xf32> to vector<16x16xf32>
    %76 = vector.shape_cast %75 : vector<16x16xf32> to vector<2x8x16xf32>
    %77 = vector.extract_strided_slice %68 {offsets = [0, 48], sizes = [16, 16], strides = [1, 1]} : vector<16x96xf32> to vector<16x16xf32>
    %78 = vector.shape_cast %77 : vector<16x16xf32> to vector<2x8x16xf32>
    %79 = tpu.concatenate %76, %78 in 0 : vector<2x8x16xf32>, vector<2x8x16xf32> -> vector<4x8x16xf32>
    %80 = arith.truncf %79 : vector<4x8x16xf32> to vector<4x8x16xbf16>
    %81 = vector.extract_strided_slice %68 {offsets = [0, 64], sizes = [16, 16], strides = [1, 1]} : vector<16x96xf32> to vector<16x16xf32>
    %82 = vector.shape_cast %81 : vector<16x16xf32> to vector<2x8x16xf32>
    %83 = vector.extract_strided_slice %68 {offsets = [0, 80], sizes = [16, 16], strides = [1, 1]} : vector<16x96xf32> to vector<16x16xf32>
    %84 = vector.shape_cast %83 : vector<16x16xf32> to vector<2x8x16xf32>
    %85 = tpu.concatenate %82, %84 in 0 : vector<2x8x16xf32>, vector<2x8x16xf32> -> vector<4x8x16xf32>
    %86 = arith.truncf %85 : vector<4x8x16xf32> to vector<4x8x16xbf16>
    "tpu.trace_start"() <{level = 10 : i32, message = "gqd,gkd->gqk"}> : () -> ()
    %cst_25 = arith.constant dense<0.000000e+00> : vector<4x8x8xf32>
    %87 = tpu.matmul %74, %80, %cst_25 {dimension_numbers = #tpu.dot_dimension_numbers<[2], [2], [1], [1], [0, 0, 0, 1, 1, 1], [0], [0]>} : vector<4x8x16xbf16>, vector<4x8x16xbf16>, vector<4x8x8xf32> -> vector<4x8x8xf32>
    "tpu.trace_stop"() : () -> ()
    %cst_26 = arith.constant 2.500000e-01 : f32
    %88 = vector.broadcast %cst_26 : f32 to vector<4x8x8xf32>
    %89 = arith.mulf %87, %88 : vector<4x8x8xf32>
    %90 = vector.broadcast %61 : vector<4x1x8xf32> to vector<4x8x8xf32>
    %91 = arith.addf %89, %90 : vector<4x8x8xf32>
    %cst_27 = arith.constant dense<0xFF800000> : vector<4x8xf32>
    %92 = vector.multi_reduction <maximumf>, %91, %cst_27 [2] : vector<4x8x8xf32> to vector<4x8xf32>
    %93 = vector.shape_cast %92 : vector<4x8xf32> to vector<4x8x1xf32>
    %94 = vector.broadcast %93 : vector<4x8x1xf32> to vector<4x8x8xf32>
    %95 = arith.subf %91, %94 : vector<4x8x8xf32>
    %96 = math.exp %95 : vector<4x8x8xf32>
    %cst_28 = arith.constant dense<0.000000e+00> : vector<4x8xf32>
    %97 = vector.multi_reduction <add>, %96, %cst_28 [2] : vector<4x8x8xf32> to vector<4x8xf32>
    %98 = vector.shape_cast %97 : vector<4x8xf32> to vector<4x8x1xf32>
    %99 = vector.broadcast %98 : vector<4x8x1xf32> to vector<4x8x8xf32>
    %100 = arith.divf %96, %99 : vector<4x8x8xf32>
    %101 = arith.truncf %100 : vector<4x8x8xf32> to vector<4x8x8xbf16>
    "tpu.trace_start"() <{level = 10 : i32, message = "gqk,gkd->gqd"}> : () -> ()
    %cst_29 = arith.constant dense<0.000000e+00> : vector<4x8x16xf32>
    %102 = tpu.matmul %101, %86, %cst_29 {dimension_numbers = #tpu.dot_dimension_numbers<[2], [1], [1], [2], [0, 0, 0, 1, 1, 2], [0], [0]>} : vector<4x8x8xbf16>, vector<4x8x16xbf16>, vector<4x8x16xf32> -> vector<4x8x16xf32>
    "tpu.trace_stop"() : () -> ()
    %c3 = arith.constant 3 : index
    %c0_30 = arith.constant 0 : index
    %103 = vector.load %arg1[%c3, %c0_30] : memref<20x128xf32, #tpu.memory_space<vmem>>, vector<1x32xf32>
    %104 = vector.extract_strided_slice %62 {offsets = [0, 96], sizes = [32, 32], strides = [1, 1]} : vector<32x192xbf16> to vector<32x32xbf16>
    %105 = vector.extract_strided_slice %102 {offsets = [0, 0, 0], sizes = [2, 8, 16], strides = [1, 1, 1]} : vector<4x8x16xf32> to vector<2x8x16xf32>
    %106 = vector.shape_cast %105 : vector<2x8x16xf32> to vector<16x16xf32>
    %107 = arith.truncf %106 : vector<16x16xf32> to vector<16x16xbf16>
    %108 = vector.extract_strided_slice %104 {offsets = [0, 0], sizes = [16, 32], strides = [1, 1]} : vector<32x32xbf16> to vector<16x32xbf16>
    %cst_31 = arith.constant dense<0.000000e+00> : vector<16x32xf32>
    %109 = tpu.matmul %107, %108, %cst_31 {dimension_numbers = #tpu.dot_dimension_numbers<[1], [0], [0], [1], [0, 0, 1, 1], [], []>} : vector<16x16xbf16>, vector<16x32xbf16>, vector<16x32xf32> -> vector<16x32xf32>
    %110 = vector.broadcast %103 : vector<1x32xf32> to vector<16x32xf32>
    %111 = arith.addf %110, %109 : vector<16x32xf32>
    %112 = vector.extract_strided_slice %102 {offsets = [2, 0, 0], sizes = [2, 8, 16], strides = [1, 1, 1]} : vector<4x8x16xf32> to vector<2x8x16xf32>
    %113 = vector.shape_cast %112 : vector<2x8x16xf32> to vector<16x16xf32>
    %114 = arith.truncf %113 : vector<16x16xf32> to vector<16x16xbf16>
    %115 = vector.extract_strided_slice %104 {offsets = [16, 0], sizes = [16, 32], strides = [1, 1]} : vector<32x32xbf16> to vector<16x32xbf16>
    %cst_32 = arith.constant dense<0.000000e+00> : vector<16x32xf32>
    %116 = tpu.matmul %114, %115, %cst_32 {dimension_numbers = #tpu.dot_dimension_numbers<[1], [0], [0], [1], [0, 0, 1, 1], [], []>} : vector<16x16xbf16>, vector<16x32xbf16>, vector<16x32xf32> -> vector<16x32xf32>
    %117 = arith.addf %111, %116 : vector<16x32xf32>
    %118 = arith.addf %55, %117 : vector<16x32xf32>
    %c4 = arith.constant 4 : index
    %c0_33 = arith.constant 0 : index
    %119 = vector.load %arg1[%c4, %c0_33] : memref<20x128xf32, #tpu.memory_space<vmem>>, vector<1x32xf32>
    %c5 = arith.constant 5 : index
    %c0_34 = arith.constant 0 : index
    %120 = vector.load %arg1[%c5, %c0_34] : memref<20x128xf32, #tpu.memory_space<vmem>>, vector<1x32xf32>
    %cst_35 = arith.constant dense<0.000000e+00> : vector<16xf32>
    %121 = vector.multi_reduction <add>, %118, %cst_35 [1] : vector<16x32xf32> to vector<16xf32>
    %122 = vector.shape_cast %121 : vector<16xf32> to vector<16x1xf32>
    %cst_36 = arith.constant 3.200000e+01 : f32
    %123 = vector.broadcast %cst_36 : f32 to vector<16x1xf32>
    %124 = arith.divf %122, %123 : vector<16x1xf32>
    %125 = vector.broadcast %124 : vector<16x1xf32> to vector<16x32xf32>
    %126 = arith.subf %118, %125 : vector<16x32xf32>
    %127 = arith.mulf %126, %126 : vector<16x32xf32>
    %cst_37 = arith.constant dense<0.000000e+00> : vector<16xf32>
    %128 = vector.multi_reduction <add>, %127, %cst_37 [1] : vector<16x32xf32> to vector<16xf32>
    %129 = vector.shape_cast %128 : vector<16xf32> to vector<16x1xf32>
    %cst_38 = arith.constant 3.200000e+01 : f32
    %130 = vector.broadcast %cst_38 : f32 to vector<16x1xf32>
    %131 = arith.divf %129, %130 : vector<16x1xf32>
    %132 = vector.broadcast %124 : vector<16x1xf32> to vector<16x32xf32>
    %133 = arith.subf %118, %132 : vector<16x32xf32>
    %cst_39 = arith.constant 9.99999996E-13 : f32
    %134 = vector.broadcast %cst_39 : f32 to vector<16x1xf32>
    %135 = arith.addf %131, %134 : vector<16x1xf32>
    %136 = math.rsqrt %135 : vector<16x1xf32>
    %137 = vector.broadcast %136 : vector<16x1xf32> to vector<16x32xf32>
    %138 = arith.mulf %133, %137 : vector<16x32xf32>
    %139 = vector.broadcast %119 : vector<1x32xf32> to vector<16x32xf32>
    %140 = arith.mulf %138, %139 : vector<16x32xf32>
    %141 = vector.broadcast %120 : vector<1x32xf32> to vector<16x32xf32>
    %142 = arith.addf %140, %141 : vector<16x32xf32>
    %143 = arith.truncf %142 : vector<16x32xf32> to vector<16x32xbf16>
    %144 = vector.extract_strided_slice %62 {offsets = [0, 128], sizes = [32, 64], strides = [1, 1]} : vector<32x192xbf16> to vector<32x64xbf16>
    %cst_40 = arith.constant dense<0.000000e+00> : vector<16x64xf32>
    %145 = tpu.matmul %143, %144, %cst_40 {dimension_numbers = #tpu.dot_dimension_numbers<[1], [0], [0], [1], [0, 0, 1, 1], [], []>} : vector<16x32xbf16>, vector<32x64xbf16>, vector<16x64xf32> -> vector<16x64xf32>
    %c6 = arith.constant 6 : index
    %c0_41 = arith.constant 0 : index
    %146 = vector.load %arg1[%c6, %c0_41] : memref<20x128xf32, #tpu.memory_space<vmem>>, vector<1x64xf32>
    %147 = vector.broadcast %146 : vector<1x64xf32> to vector<16x64xf32>
    %148 = arith.addf %145, %147 : vector<16x64xf32>
    %149 = arith.mulf %148, %148 : vector<16x64xf32>
    %150 = arith.mulf %148, %149 : vector<16x64xf32>
    %cst_42 = arith.constant 4.471500e-02 : f32
    %151 = vector.broadcast %cst_42 : f32 to vector<16x64xf32>
    %152 = arith.mulf %151, %150 : vector<16x64xf32>
    %153 = arith.addf %148, %152 : vector<16x64xf32>
    %cst_43 = arith.constant 0.797884583 : f32
    %154 = vector.broadcast %cst_43 : f32 to vector<16x64xf32>
    %155 = arith.mulf %154, %153 : vector<16x64xf32>
    %156 = math.tanh %155 : vector<16x64xf32>
    %cst_44 = arith.constant 1.000000e+00 : f32
    %157 = vector.broadcast %cst_44 : f32 to vector<16x64xf32>
    %158 = arith.addf %157, %156 : vector<16x64xf32>
    %cst_45 = arith.constant 5.000000e-01 : f32
    %159 = vector.broadcast %cst_45 : f32 to vector<16x64xf32>
    %160 = arith.mulf %159, %158 : vector<16x64xf32>
    %161 = arith.mulf %148, %160 : vector<16x64xf32>
    %162 = arith.truncf %161 : vector<16x64xf32> to vector<16x64xbf16>
    %c160 = arith.constant 160 : index
    %c0_46 = arith.constant 0 : index
    %163 = vector.load %arg2[%c160, %c0_46] : memref<320x192xbf16, #tpu.memory_space<vmem>>, vector<64x32xbf16>
    %cst_47 = arith.constant dense<0.000000e+00> : vector<16x32xf32>
    %164 = tpu.matmul %162, %163, %cst_47 {dimension_numbers = #tpu.dot_dimension_numbers<[1], [0], [0], [1], [0, 0, 1, 1], [], []>} : vector<16x64xbf16>, vector<64x32xbf16>, vector<16x32xf32> -> vector<16x32xf32>
    %c7 = arith.constant 7 : index
    %c0_48 = arith.constant 0 : index
    %165 = vector.load %arg1[%c7, %c0_48] : memref<20x128xf32, #tpu.memory_space<vmem>>, vector<1x32xf32>
    %166 = vector.broadcast %165 : vector<1x32xf32> to vector<16x32xf32>
    %167 = arith.addf %164, %166 : vector<16x32xf32>
    %168 = arith.addf %142, %167 : vector<16x32xf32>
    %c8_49 = arith.constant 8 : index
    %c0_50 = arith.constant 0 : index
    %169 = vector.load %arg1[%c8_49, %c0_50] : memref<20x128xf32, #tpu.memory_space<vmem>>, vector<1x32xf32>
    %c9 = arith.constant 9 : index
    %c0_51 = arith.constant 0 : index
    %170 = vector.load %arg1[%c9, %c0_51] : memref<20x128xf32, #tpu.memory_space<vmem>>, vector<1x32xf32>
    %cst_52 = arith.constant dense<0.000000e+00> : vector<16xf32>
    %171 = vector.multi_reduction <add>, %168, %cst_52 [1] : vector<16x32xf32> to vector<16xf32>
    %172 = vector.shape_cast %171 : vector<16xf32> to vector<16x1xf32>
    %cst_53 = arith.constant 3.200000e+01 : f32
    %173 = vector.broadcast %cst_53 : f32 to vector<16x1xf32>
    %174 = arith.divf %172, %173 : vector<16x1xf32>
    %175 = vector.broadcast %174 : vector<16x1xf32> to vector<16x32xf32>
    %176 = arith.subf %168, %175 : vector<16x32xf32>
    %177 = arith.mulf %176, %176 : vector<16x32xf32>
    %cst_54 = arith.constant dense<0.000000e+00> : vector<16xf32>
    %178 = vector.multi_reduction <add>, %177, %cst_54 [1] : vector<16x32xf32> to vector<16xf32>
    %179 = vector.shape_cast %178 : vector<16xf32> to vector<16x1xf32>
    %cst_55 = arith.constant 3.200000e+01 : f32
    %180 = vector.broadcast %cst_55 : f32 to vector<16x1xf32>
    %181 = arith.divf %179, %180 : vector<16x1xf32>
    %182 = vector.broadcast %174 : vector<16x1xf32> to vector<16x32xf32>
    %183 = arith.subf %168, %182 : vector<16x32xf32>
    %cst_56 = arith.constant 9.99999996E-13 : f32
    %184 = vector.broadcast %cst_56 : f32 to vector<16x1xf32>
    %185 = arith.addf %181, %184 : vector<16x1xf32>
    %186 = math.rsqrt %185 : vector<16x1xf32>
    %187 = vector.broadcast %186 : vector<16x1xf32> to vector<16x32xf32>
    %188 = arith.mulf %183, %187 : vector<16x32xf32>
    %189 = vector.broadcast %169 : vector<1x32xf32> to vector<16x32xf32>
    %190 = arith.mulf %188, %189 : vector<16x32xf32>
    %191 = vector.broadcast %170 : vector<1x32xf32> to vector<16x32xf32>
    %192 = arith.addf %190, %191 : vector<16x32xf32>
    %c128 = arith.constant 128 : index
    %c0_57 = arith.constant 0 : index
    %193 = vector.load %arg2[%c128, %c0_57] : memref<320x192xbf16, #tpu.memory_space<vmem>>, vector<32x192xbf16>
    %194 = arith.truncf %192 : vector<16x32xf32> to vector<16x32xbf16>
    %195 = vector.extract_strided_slice %193 {offsets = [0, 0], sizes = [32, 96], strides = [1, 1]} : vector<32x192xbf16> to vector<32x96xbf16>
    %cst_58 = arith.constant dense<0.000000e+00> : vector<16x96xf32>
    %196 = tpu.matmul %194, %195, %cst_58 {dimension_numbers = #tpu.dot_dimension_numbers<[1], [0], [0], [1], [0, 0, 1, 1], [], []>} : vector<16x32xbf16>, vector<32x96xbf16>, vector<16x96xf32> -> vector<16x96xf32>
    %c10 = arith.constant 10 : index
    %c0_59 = arith.constant 0 : index
    %197 = vector.load %arg1[%c10, %c0_59] : memref<20x128xf32, #tpu.memory_space<vmem>>, vector<1x96xf32>
    %198 = vector.broadcast %197 : vector<1x96xf32> to vector<16x96xf32>
    %199 = arith.addf %196, %198 : vector<16x96xf32>
    %200 = vector.extract_strided_slice %199 {offsets = [0, 0], sizes = [16, 16], strides = [1, 1]} : vector<16x96xf32> to vector<16x16xf32>
    %201 = vector.shape_cast %200 : vector<16x16xf32> to vector<2x8x16xf32>
    %202 = vector.extract_strided_slice %199 {offsets = [0, 16], sizes = [16, 16], strides = [1, 1]} : vector<16x96xf32> to vector<16x16xf32>
    %203 = vector.shape_cast %202 : vector<16x16xf32> to vector<2x8x16xf32>
    %204 = tpu.concatenate %201, %203 in 0 : vector<2x8x16xf32>, vector<2x8x16xf32> -> vector<4x8x16xf32>
    %205 = arith.truncf %204 : vector<4x8x16xf32> to vector<4x8x16xbf16>
    %206 = vector.extract_strided_slice %199 {offsets = [0, 32], sizes = [16, 16], strides = [1, 1]} : vector<16x96xf32> to vector<16x16xf32>
    %207 = vector.shape_cast %206 : vector<16x16xf32> to vector<2x8x16xf32>
    %208 = vector.extract_strided_slice %199 {offsets = [0, 48], sizes = [16, 16], strides = [1, 1]} : vector<16x96xf32> to vector<16x16xf32>
    %209 = vector.shape_cast %208 : vector<16x16xf32> to vector<2x8x16xf32>
    %210 = tpu.concatenate %207, %209 in 0 : vector<2x8x16xf32>, vector<2x8x16xf32> -> vector<4x8x16xf32>
    %211 = arith.truncf %210 : vector<4x8x16xf32> to vector<4x8x16xbf16>
    %212 = vector.extract_strided_slice %199 {offsets = [0, 64], sizes = [16, 16], strides = [1, 1]} : vector<16x96xf32> to vector<16x16xf32>
    %213 = vector.shape_cast %212 : vector<16x16xf32> to vector<2x8x16xf32>
    %214 = vector.extract_strided_slice %199 {offsets = [0, 80], sizes = [16, 16], strides = [1, 1]} : vector<16x96xf32> to vector<16x16xf32>
    %215 = vector.shape_cast %214 : vector<16x16xf32> to vector<2x8x16xf32>
    %216 = tpu.concatenate %213, %215 in 0 : vector<2x8x16xf32>, vector<2x8x16xf32> -> vector<4x8x16xf32>
    %217 = arith.truncf %216 : vector<4x8x16xf32> to vector<4x8x16xbf16>
    "tpu.trace_start"() <{level = 10 : i32, message = "gqd,gkd->gqk"}> : () -> ()
    %cst_60 = arith.constant dense<0.000000e+00> : vector<4x8x8xf32>
    %218 = tpu.matmul %205, %211, %cst_60 {dimension_numbers = #tpu.dot_dimension_numbers<[2], [2], [1], [1], [0, 0, 0, 1, 1, 1], [0], [0]>} : vector<4x8x16xbf16>, vector<4x8x16xbf16>, vector<4x8x8xf32> -> vector<4x8x8xf32>
    "tpu.trace_stop"() : () -> ()
    %cst_61 = arith.constant 2.500000e-01 : f32
    %219 = vector.broadcast %cst_61 : f32 to vector<4x8x8xf32>
    %220 = arith.mulf %218, %219 : vector<4x8x8xf32>
    %221 = vector.broadcast %61 : vector<4x1x8xf32> to vector<4x8x8xf32>
    %222 = arith.addf %220, %221 : vector<4x8x8xf32>
    %cst_62 = arith.constant dense<0xFF800000> : vector<4x8xf32>
    %223 = vector.multi_reduction <maximumf>, %222, %cst_62 [2] : vector<4x8x8xf32> to vector<4x8xf32>
    %224 = vector.shape_cast %223 : vector<4x8xf32> to vector<4x8x1xf32>
    %225 = vector.broadcast %224 : vector<4x8x1xf32> to vector<4x8x8xf32>
    %226 = arith.subf %222, %225 : vector<4x8x8xf32>
    %227 = math.exp %226 : vector<4x8x8xf32>
    %cst_63 = arith.constant dense<0.000000e+00> : vector<4x8xf32>
    %228 = vector.multi_reduction <add>, %227, %cst_63 [2] : vector<4x8x8xf32> to vector<4x8xf32>
    %229 = vector.shape_cast %228 : vector<4x8xf32> to vector<4x8x1xf32>
    %230 = vector.broadcast %229 : vector<4x8x1xf32> to vector<4x8x8xf32>
    %231 = arith.divf %227, %230 : vector<4x8x8xf32>
    %232 = arith.truncf %231 : vector<4x8x8xf32> to vector<4x8x8xbf16>
    "tpu.trace_start"() <{level = 10 : i32, message = "gqk,gkd->gqd"}> : () -> ()
    %cst_64 = arith.constant dense<0.000000e+00> : vector<4x8x16xf32>
    %233 = tpu.matmul %232, %217, %cst_64 {dimension_numbers = #tpu.dot_dimension_numbers<[2], [1], [1], [2], [0, 0, 0, 1, 1, 2], [0], [0]>} : vector<4x8x8xbf16>, vector<4x8x16xbf16>, vector<4x8x16xf32> -> vector<4x8x16xf32>
    "tpu.trace_stop"() : () -> ()
    %c11 = arith.constant 11 : index
    %c0_65 = arith.constant 0 : index
    %234 = vector.load %arg1[%c11, %c0_65] : memref<20x128xf32, #tpu.memory_space<vmem>>, vector<1x32xf32>
    %235 = vector.extract_strided_slice %193 {offsets = [0, 96], sizes = [32, 32], strides = [1, 1]} : vector<32x192xbf16> to vector<32x32xbf16>
    %236 = vector.extract_strided_slice %233 {offsets = [0, 0, 0], sizes = [2, 8, 16], strides = [1, 1, 1]} : vector<4x8x16xf32> to vector<2x8x16xf32>
    %237 = vector.shape_cast %236 : vector<2x8x16xf32> to vector<16x16xf32>
    %238 = arith.truncf %237 : vector<16x16xf32> to vector<16x16xbf16>
    %239 = vector.extract_strided_slice %235 {offsets = [0, 0], sizes = [16, 32], strides = [1, 1]} : vector<32x32xbf16> to vector<16x32xbf16>
    %cst_66 = arith.constant dense<0.000000e+00> : vector<16x32xf32>
    %240 = tpu.matmul %238, %239, %cst_66 {dimension_numbers = #tpu.dot_dimension_numbers<[1], [0], [0], [1], [0, 0, 1, 1], [], []>} : vector<16x16xbf16>, vector<16x32xbf16>, vector<16x32xf32> -> vector<16x32xf32>
    %241 = vector.broadcast %234 : vector<1x32xf32> to vector<16x32xf32>
    %242 = arith.addf %241, %240 : vector<16x32xf32>
    %243 = vector.extract_strided_slice %233 {offsets = [2, 0, 0], sizes = [2, 8, 16], strides = [1, 1, 1]} : vector<4x8x16xf32> to vector<2x8x16xf32>
    %244 = vector.shape_cast %243 : vector<2x8x16xf32> to vector<16x16xf32>
    %245 = arith.truncf %244 : vector<16x16xf32> to vector<16x16xbf16>
    %246 = vector.extract_strided_slice %235 {offsets = [16, 0], sizes = [16, 32], strides = [1, 1]} : vector<32x32xbf16> to vector<16x32xbf16>
    %cst_67 = arith.constant dense<0.000000e+00> : vector<16x32xf32>
    %247 = tpu.matmul %245, %246, %cst_67 {dimension_numbers = #tpu.dot_dimension_numbers<[1], [0], [0], [1], [0, 0, 1, 1], [], []>} : vector<16x16xbf16>, vector<16x32xbf16>, vector<16x32xf32> -> vector<16x32xf32>
    %248 = arith.addf %242, %247 : vector<16x32xf32>
    %249 = arith.addf %192, %248 : vector<16x32xf32>
    %c12 = arith.constant 12 : index
    %c0_68 = arith.constant 0 : index
    %250 = vector.load %arg1[%c12, %c0_68] : memref<20x128xf32, #tpu.memory_space<vmem>>, vector<1x32xf32>
    %c13 = arith.constant 13 : index
    %c0_69 = arith.constant 0 : index
    %251 = vector.load %arg1[%c13, %c0_69] : memref<20x128xf32, #tpu.memory_space<vmem>>, vector<1x32xf32>
    %cst_70 = arith.constant dense<0.000000e+00> : vector<16xf32>
    %252 = vector.multi_reduction <add>, %249, %cst_70 [1] : vector<16x32xf32> to vector<16xf32>
    %253 = vector.shape_cast %252 : vector<16xf32> to vector<16x1xf32>
    %cst_71 = arith.constant 3.200000e+01 : f32
    %254 = vector.broadcast %cst_71 : f32 to vector<16x1xf32>
    %255 = arith.divf %253, %254 : vector<16x1xf32>
    %256 = vector.broadcast %255 : vector<16x1xf32> to vector<16x32xf32>
    %257 = arith.subf %249, %256 : vector<16x32xf32>
    %258 = arith.mulf %257, %257 : vector<16x32xf32>
    %cst_72 = arith.constant dense<0.000000e+00> : vector<16xf32>
    %259 = vector.multi_reduction <add>, %258, %cst_72 [1] : vector<16x32xf32> to vector<16xf32>
    %260 = vector.shape_cast %259 : vector<16xf32> to vector<16x1xf32>
    %cst_73 = arith.constant 3.200000e+01 : f32
    %261 = vector.broadcast %cst_73 : f32 to vector<16x1xf32>
    %262 = arith.divf %260, %261 : vector<16x1xf32>
    %263 = vector.broadcast %255 : vector<16x1xf32> to vector<16x32xf32>
    %264 = arith.subf %249, %263 : vector<16x32xf32>
    %cst_74 = arith.constant 9.99999996E-13 : f32
    %265 = vector.broadcast %cst_74 : f32 to vector<16x1xf32>
    %266 = arith.addf %262, %265 : vector<16x1xf32>
    %267 = math.rsqrt %266 : vector<16x1xf32>
    %268 = vector.broadcast %267 : vector<16x1xf32> to vector<16x32xf32>
    %269 = arith.mulf %264, %268 : vector<16x32xf32>
    %270 = vector.broadcast %250 : vector<1x32xf32> to vector<16x32xf32>
    %271 = arith.mulf %269, %270 : vector<16x32xf32>
    %272 = vector.broadcast %251 : vector<1x32xf32> to vector<16x32xf32>
    %273 = arith.addf %271, %272 : vector<16x32xf32>
    %274 = arith.truncf %273 : vector<16x32xf32> to vector<16x32xbf16>
    %275 = vector.extract_strided_slice %193 {offsets = [0, 128], sizes = [32, 64], strides = [1, 1]} : vector<32x192xbf16> to vector<32x64xbf16>
    %cst_75 = arith.constant dense<0.000000e+00> : vector<16x64xf32>
    %276 = tpu.matmul %274, %275, %cst_75 {dimension_numbers = #tpu.dot_dimension_numbers<[1], [0], [0], [1], [0, 0, 1, 1], [], []>} : vector<16x32xbf16>, vector<32x64xbf16>, vector<16x64xf32> -> vector<16x64xf32>
    %c14 = arith.constant 14 : index
    %c0_76 = arith.constant 0 : index
    %277 = vector.load %arg1[%c14, %c0_76] : memref<20x128xf32, #tpu.memory_space<vmem>>, vector<1x64xf32>
    %278 = vector.broadcast %277 : vector<1x64xf32> to vector<16x64xf32>
    %279 = arith.addf %276, %278 : vector<16x64xf32>
    %280 = arith.mulf %279, %279 : vector<16x64xf32>
    %281 = arith.mulf %279, %280 : vector<16x64xf32>
    %cst_77 = arith.constant 4.471500e-02 : f32
    %282 = vector.broadcast %cst_77 : f32 to vector<16x64xf32>
    %283 = arith.mulf %282, %281 : vector<16x64xf32>
    %284 = arith.addf %279, %283 : vector<16x64xf32>
    %cst_78 = arith.constant 0.797884583 : f32
    %285 = vector.broadcast %cst_78 : f32 to vector<16x64xf32>
    %286 = arith.mulf %285, %284 : vector<16x64xf32>
    %287 = math.tanh %286 : vector<16x64xf32>
    %cst_79 = arith.constant 1.000000e+00 : f32
    %288 = vector.broadcast %cst_79 : f32 to vector<16x64xf32>
    %289 = arith.addf %288, %287 : vector<16x64xf32>
    %cst_80 = arith.constant 5.000000e-01 : f32
    %290 = vector.broadcast %cst_80 : f32 to vector<16x64xf32>
    %291 = arith.mulf %290, %289 : vector<16x64xf32>
    %292 = arith.mulf %279, %291 : vector<16x64xf32>
    %293 = arith.truncf %292 : vector<16x64xf32> to vector<16x64xbf16>
    %c224 = arith.constant 224 : index
    %c0_81 = arith.constant 0 : index
    %294 = vector.load %arg2[%c224, %c0_81] : memref<320x192xbf16, #tpu.memory_space<vmem>>, vector<64x32xbf16>
    %cst_82 = arith.constant dense<0.000000e+00> : vector<16x32xf32>
    %295 = tpu.matmul %293, %294, %cst_82 {dimension_numbers = #tpu.dot_dimension_numbers<[1], [0], [0], [1], [0, 0, 1, 1], [], []>} : vector<16x64xbf16>, vector<64x32xbf16>, vector<16x32xf32> -> vector<16x32xf32>
    %c15 = arith.constant 15 : index
    %c0_83 = arith.constant 0 : index
    %296 = vector.load %arg1[%c15, %c0_83] : memref<20x128xf32, #tpu.memory_space<vmem>>, vector<1x32xf32>
    %297 = vector.broadcast %296 : vector<1x32xf32> to vector<16x32xf32>
    %298 = arith.addf %295, %297 : vector<16x32xf32>
    %299 = arith.addf %273, %298 : vector<16x32xf32>
    %c16 = arith.constant 16 : index
    %c0_84 = arith.constant 0 : index
    %300 = vector.load %arg1[%c16, %c0_84] : memref<20x128xf32, #tpu.memory_space<vmem>>, vector<1x32xf32>
    %c17 = arith.constant 17 : index
    %c0_85 = arith.constant 0 : index
    %301 = vector.load %arg1[%c17, %c0_85] : memref<20x128xf32, #tpu.memory_space<vmem>>, vector<1x32xf32>
    %cst_86 = arith.constant dense<0.000000e+00> : vector<16xf32>
    %302 = vector.multi_reduction <add>, %299, %cst_86 [1] : vector<16x32xf32> to vector<16xf32>
    %303 = vector.shape_cast %302 : vector<16xf32> to vector<16x1xf32>
    %cst_87 = arith.constant 3.200000e+01 : f32
    %304 = vector.broadcast %cst_87 : f32 to vector<16x1xf32>
    %305 = arith.divf %303, %304 : vector<16x1xf32>
    %306 = vector.broadcast %305 : vector<16x1xf32> to vector<16x32xf32>
    %307 = arith.subf %299, %306 : vector<16x32xf32>
    %308 = arith.mulf %307, %307 : vector<16x32xf32>
    %cst_88 = arith.constant dense<0.000000e+00> : vector<16xf32>
    %309 = vector.multi_reduction <add>, %308, %cst_88 [1] : vector<16x32xf32> to vector<16xf32>
    %310 = vector.shape_cast %309 : vector<16xf32> to vector<16x1xf32>
    %cst_89 = arith.constant 3.200000e+01 : f32
    %311 = vector.broadcast %cst_89 : f32 to vector<16x1xf32>
    %312 = arith.divf %310, %311 : vector<16x1xf32>
    %313 = vector.broadcast %305 : vector<16x1xf32> to vector<16x32xf32>
    %314 = arith.subf %299, %313 : vector<16x32xf32>
    %cst_90 = arith.constant 9.99999996E-13 : f32
    %315 = vector.broadcast %cst_90 : f32 to vector<16x1xf32>
    %316 = arith.addf %312, %315 : vector<16x1xf32>
    %317 = math.rsqrt %316 : vector<16x1xf32>
    %318 = vector.broadcast %317 : vector<16x1xf32> to vector<16x32xf32>
    %319 = arith.mulf %314, %318 : vector<16x32xf32>
    %320 = vector.broadcast %300 : vector<1x32xf32> to vector<16x32xf32>
    %321 = arith.mulf %319, %320 : vector<16x32xf32>
    %322 = vector.broadcast %301 : vector<1x32xf32> to vector<16x32xf32>
    %323 = arith.addf %321, %322 : vector<16x32xf32>
    %324 = vector.shape_cast %323 : vector<16x32xf32> to vector<2x8x32xf32>
    %325 = vector.extract_strided_slice %324 {offsets = [0, 0, 0], sizes = [2, 1, 32], strides = [1, 1, 1]} : vector<2x8x32xf32> to vector<2x1x32xf32>
    %326 = vector.shape_cast %325 : vector<2x1x32xf32> to vector<2x32xf32>
    %c288 = arith.constant 288 : index
    %c0_91 = arith.constant 0 : index
    %327 = vector.load %arg2[%c288, %c0_91] : memref<320x192xbf16, #tpu.memory_space<vmem>>, vector<32x192xbf16>
    %328 = arith.truncf %326 : vector<2x32xf32> to vector<2x32xbf16>
    %329 = vector.extract_strided_slice %327 {offsets = [0, 128], sizes = [32, 32], strides = [1, 1]} : vector<32x192xbf16> to vector<32x32xbf16>
    %cst_92 = arith.constant dense<0.000000e+00> : vector<2x32xf32>
    %330 = tpu.matmul %328, %329, %cst_92 {dimension_numbers = #tpu.dot_dimension_numbers<[1], [0], [0], [1], [0, 0, 1, 1], [], []>} : vector<2x32xbf16>, vector<32x32xbf16>, vector<2x32xf32> -> vector<2x32xf32>
    %c18 = arith.constant 18 : index
    %c0_93 = arith.constant 0 : index
    %331 = vector.load %arg1[%c18, %c0_93] : memref<20x128xf32, #tpu.memory_space<vmem>>, vector<1x32xf32>
    %332 = vector.broadcast %331 : vector<1x32xf32> to vector<2x32xf32>
    %333 = arith.addf %330, %332 : vector<2x32xf32>
    %334 = math.tanh %333 : vector<2x32xf32>
    %335 = arith.truncf %334 : vector<2x32xf32> to vector<2x32xbf16>
    %336 = vector.extract_strided_slice %327 {offsets = [0, 0], sizes = [32, 128], strides = [1, 1]} : vector<32x192xbf16> to vector<32x128xbf16>
    %cst_94 = arith.constant dense<0.000000e+00> : vector<2x128xf32>
    %337 = tpu.matmul %335, %336, %cst_94 {dimension_numbers = #tpu.dot_dimension_numbers<[1], [0], [0], [1], [0, 0, 1, 1], [], []>} : vector<2x32xbf16>, vector<32x128xbf16>, vector<2x128xf32> -> vector<2x128xf32>
    %c19 = arith.constant 19 : index
    %c0_95 = arith.constant 0 : index
    %338 = vector.load %arg1[%c19, %c0_95] : memref<20x128xf32, #tpu.memory_space<vmem>>, vector<1x128xf32>
    %339 = vector.broadcast %338 : vector<1x128xf32> to vector<2x128xf32>
    %340 = arith.addf %337, %339 : vector<2x128xf32>
    %c0_96 = arith.constant 0 : index
    %c0_97 = arith.constant 0 : index
    %341 = vector.load %arg3[%c0_96, %c0_97] : memref<2x128xf32, #tpu.memory_space<vmem>>, vector<2x128xf32>
    tpu.vector_store %arg3[%c0_96, %c0_97], %340 {strides = array<i32>} : memref<2x128xf32, #tpu.memory_space<vmem>>, vector<2x128xf32>,
    %342 = tpu.iota {dimensions = array<i32: 1>} : vector<2x128xi32>
    %343 = vector.broadcast %3 : vector<2x1xi32> to vector<2x128xi32>
    %344 = arith.cmpi eq, %342, %343 : vector<2x128xi32>
    %345 = arith.extui %344 : vector<2x128xi1> to vector<2x128xi32>
    %346 = arith.sitofp %345 : vector<2x128xi32> to vector<2x128xf32>
    %c2_i32 = arith.constant 2 : i32
    %347 = vector.broadcast %c2_i32 : i32 to vector<2x128xi32>
    %348 = arith.cmpi slt, %342, %347 : vector<2x128xi32>
    %cst_98 = arith.constant 0.000000e+00 : f32
    %cst_99 = arith.constant -1.000000e+30 : f32
    %349 = vector.broadcast %cst_98 : f32 to vector<2x128xf32>
    %350 = vector.broadcast %cst_99 : f32 to vector<2x128xf32>
    %351 = arith.select %348, %349, %350 : vector<2x128xi1>, vector<2x128xf32>
    %352 = arith.addf %340, %351 : vector<2x128xf32>
    %cst_100 = arith.constant dense<0xFF800000> : vector<2xf32>
    %353 = vector.multi_reduction <maximumf>, %352, %cst_100 [1] : vector<2x128xf32> to vector<2xf32>
    %354 = vector.shape_cast %353 : vector<2xf32> to vector<2x1xf32>
    %355 = vector.broadcast %354 : vector<2x1xf32> to vector<2x128xf32>
    %356 = arith.subf %352, %355 : vector<2x128xf32>
    %357 = math.exp %356 : vector<2x128xf32>
    %cst_101 = arith.constant dense<0.000000e+00> : vector<2xf32>
    %358 = vector.multi_reduction <add>, %357, %cst_101 [1] : vector<2x128xf32> to vector<2xf32>
    %359 = vector.shape_cast %358 : vector<2xf32> to vector<2x1xf32>
    %360 = math.log %359 : vector<2x1xf32>
    %361 = arith.addf %354, %360 : vector<2x1xf32>
    %362 = arith.mulf %346, %340 : vector<2x128xf32>
    %cst_102 = arith.constant dense<0.000000e+00> : vector<2xf32>
    %363 = vector.multi_reduction <add>, %362, %cst_102 [1] : vector<2x128xf32> to vector<2xf32>
    %364 = vector.shape_cast %363 : vector<2xf32> to vector<2x1xf32>
    %365 = arith.subf %361, %364 : vector<2x1xf32>
    %366 = vector.shape_cast %365 : vector<2x1xf32> to vector<1x2x1xf32>
    %cst_103 = arith.constant dense<0.000000e+00> : vector<1xf32>
    %367 = vector.multi_reduction <add>, %366, %cst_103 [1, 2] : vector<1x2x1xf32> to vector<1xf32>
    %368 = vector.shape_cast %367 : vector<1xf32> to vector<1x1x1xf32>
    %369 = vector.extract %368[0, 0, 0] : f32 from vector<1x1x1xf32>
    %cst_104 = arith.constant 2.000000e+00 : f32
    %370 = arith.divf %369, %cst_104 : f32
    %c0_105 = arith.constant 0 : index
    %c0_106 = arith.constant 0 : index
    %371 = memref.load %arg4[%c0_105, %c0_106] : memref<1x1xf32, #tpu.memory_space<smem>>
    memref.store %370, %arg4[%c0_105, %c0_106] : memref<1x1xf32, #tpu.memory_space<smem>>
    return
  }
}

</mosaic_0001>

<llo_original>
// kernel: tpu_custom_call.1
$region0: #{tpu_custom_call.1}
  #allocation0 [shape = 'u32[]', space=smem, size = 0x4, offset = 0x4, fixed_abs, tag = 'smem constant byte address 0x4 - core index']
  #allocation1 [shape = 'u32[72,128]{1,0:T(1,128)}', space=vmem, size = 0x9000, scoped, tag = 'internal scratch']
  %s0 = inlined_call_operand.vmem [shape: s32[16,16], index: 0, kind: input, shape index: {}]
  %s1 = inlined_call_operand.vmem [shape: f32[20,128], index: 1, kind: input, shape index: {}]
  %s2 = inlined_call_operand.vmem [shape: bf16[320,192], index: 2, kind: input, shape index: {}]
  %s3 = inlined_call_operand.hbm [shape: f32[2,128], index: 3, kind: output, shape index: {0}]
  %s4 = inlined_call_operand.hbm [shape: f32[1,1], index: 4, kind: output, shape index: {1}]
  %5 = xla_tuple %s3, %s4
  %s6 = sld [smem:[#allocation0]]
  $region30: #{tpu_custom_call.1} parent=0
    _
  %s8 = ssub.s32 1, %s6
  %s9 = scalar_select 0, %s8, %s6
  $region1: #{tpu_custom_call.1} parent=0
    #allocation2 [shape = 'u8[1024]{0}', space=vmem, size = 0x400, scoped, tag = 'output window, operand 0, single buffered']
    #allocation3 [shape = 's32[1]{0}', space=sflag, size = 0x4, scoped, tag = 'scoped memory for tpu_custom_call.1']
    #allocation4 [shape = 's32[1]{0}', space=sflag, size = 0x4, scoped, tag = 'scoped memory for tpu_custom_call.1']
    #allocation5 [shape = 'u8[512]{0}', space=smem, size = 0x200, scoped, tag = 'output window, operand 1, single buffered']
    %10 = vsyncpa [#allocation3], 0
    %11 = vsyncpa [#allocation4], 0
    // Predicated region
    $region2: #{tpu_custom_call.1} parent=1 // pred_check
      _
    $region3: #{tpu_custom_call.1} parent=1 // pred_check_branch
      %13 = sbr.rel (0) target = $region5
    $region4: #{tpu_custom_call.1} parent=1 // pred_region
      _
    $region5: #{tpu_custom_call.1} parent=1 // pred_fallthru
      _
    // Predicated region
    $region6: #{tpu_custom_call.1} parent=1 // pred_check
      _
    $region7: #{tpu_custom_call.1} parent=1 // pred_check_branch
      %15 = sbr.rel (0) target = $region9
    $region8: #{tpu_custom_call.1} parent=1 // pred_region
      _
    $region9: #{tpu_custom_call.1} parent=1 // pred_fallthru
      _
    // Predicated region
    $region10: #{tpu_custom_call.1} parent=1 // pred_check
      _
    $region11: #{tpu_custom_call.1} parent=1 // pred_check_branch
      %17 = sbr.rel (0) target = $region13
    $region12: #{tpu_custom_call.1} parent=1 // pred_region
      _
    $region13: #{tpu_custom_call.1} parent=1 // pred_fallthru
      _
    %v19 = vld [vmem:[%s0] sm:$0xff]
    %v20 = vld [vmem:[%s0 + $0x8] sm:$0xff]
    %v21 = vcvt.s32.f32 %v19
    %v22 = vcvt.s32.f32 %v20
    %v23 = vld [vmem:[%s0] sm:$0x3]
    %v24 = vcvt.s32.f32 %v23
    %v25 = vlaneseq
    %v26 = vand.u32 %v25, 127
    %27 = vset.pattern.permute.xlu0 0
    %28 = vperm.xlu0 %27, %v19
    %v29 = vpop.permute.xlu0 %28
    %30 = vset.pattern.permute.xlu0 0
    %31 = vperm.xlu0 %30, %v20
    %v32 = vpop.permute.xlu0 %31
    %vm33 = vcmp.eq.s32.totalorder %v26, %v29
    %vm34 = vcmp.eq.s32.totalorder %v26, %v32
    %v35 = vsel %vm33, 1, 0
    %v36 = vsel %vm34, 1, 0
    %v37 = vcvt.s32.f32 %v35
    %v38 = vcvt.s32.f32 %v36
    %v39 = vpack.c.bf16 %v38, %v37
    %v40 = vld [vmem:[%s2] sm:$0xf]
    %v41 = vld [vmem:[%s2 + $0x8] sm:$0xf]
    %v42 = vld [vmem:[%s2 + $0x10] sm:$0xf]
    %v43 = vld [vmem:[%s2 + $0x18] sm:$0xf]
    %v44 = vld [vmem:[%s2 + $0x20] sm:$0xf]
    %v45 = vld [vmem:[%s2 + $0x28] sm:$0xf]
    %v46 = vld [vmem:[%s2 + $0x30] sm:$0xf]
    %v47 = vld [vmem:[%s2 + $0x38] sm:$0xf]
    %v48 = vld [vmem:[%s2 + $0x40] sm:$0xf]
    %v49 = vunpack.c.l.bf16 %v48
    %v50 = vld [vmem:[%s2 + $0x50] sm:$0x1]
    %v51 = vunpack.c.l.bf16 %v50
    %v52 = vsub.f32 1.0, %v21
    %v53 = vsub.f32 1.0, %v22
    %55 = vset.pattern.permute.xlu0 1
    %56 = vperm.xlu0 %55, %v52
    %v57 = vpop.permute.xlu0 %56
    %60 = vset.pattern.permute.xlu0 1
    %61 = vperm.xlu0 %60, %v53
    %v62 = vpop.permute.xlu0 %61
    %v64 = vperm.slane %v51, 0
    %v65 = vmul.f32 %v57, %v64
    %v66 = vmul.f32 %v62, %v64
    %68 = vset.pattern.permute.xlu0 1
    %69 = vperm.xlu0 %68, %v21
    %v70 = vpop.permute.xlu0 %69
    %73 = vset.pattern.permute.xlu0 1
    %74 = vperm.xlu0 %73, %v22
    %v75 = vpop.permute.xlu0 %74
    %v77 = vperm.slane %v51, 1
    %v78 = vmul.f32 %v70, %v77
    %v79 = vmul.f32 %v75, %v77
    %v80 = vadd.f32 %v65, %v78
    %v81 = vadd.f32 %v66, %v79
    %v90 = vunpack.c.l.b16 %v40
    %v91 = vunpack.c.l.b16 %v41
    %v92 = vunpack.c.l.b16 %v42
    %v93 = vunpack.c.l.b16 %v43
    %v94 = vunpack.c.l.b16 %v44
    %v95 = vunpack.c.l.b16 %v45
    %v96 = vunpack.c.l.b16 %v46
    %v97 = vunpack.c.l.b16 %v47
    %v98 = vpack.c.b16 %v91, %v90
    %v99 = vpack.c.b16 %v93, %v92
    %v100 = vpack.c.b16 %v95, %v94
    %v101 = vpack.c.b16 %v97, %v96
    %vm106 = vcmask 523264
    %v108 = vsel %vm106, %v39, 0
    %110 = vmatpush.bf16.msra.mxu0 0
    %111 = vmatpush.bf16.msra.mxu0 0
    %112 = vmatpush.bf16.msra.mxu0 0
    %113 = vmatpush.bf16.msra.mxu0 0
    %114 = vmatpush.bf16.msra.mxu0 %v101
    %115 = vmatpush.bf16.msra.mxu0 %v100
    %116 = vmatpush.bf16.msra.mxu0 %v99
    %117 = vmatpush.bf16.msra.mxu0 %v98
    %118 = vmatmul.bf16.gmra.mxu0 %v108
    %v119 = vpop.f32.mrf.mxu0
    %v120 = vadd.f32 %v49, %v119
    %v121 = vpop.f32.mrf.mxu0
    %v122 = vadd.f32 %v49, %v121
    %123 = vdwg.mxu0
    %v124 = vadd.f32 %v120, %v80
    %v125 = vadd.f32 %v122, %v81
    %v126 = vld [vmem:[%s1] sm:$0x1]
    %v127 = vld [vmem:[%s1 + $0x1] sm:$0x1]
    %vm128 = vcmask 261120
    %v129 = vsel %vm128, %v124, 0.0
    %130 = vadd.xlane.f32.xlu0 %v129
    %v131 = vpop.xlane.xlu0 %130
    %v132 = vsel %vm128, %v125, 0.0
    %133 = vadd.xlane.f32.xlu0 %v132
    %v134 = vpop.xlane.xlu0 %133
    %v135 = vrcp.pop 32.0
    %v136 = vmul.f32 32.0, %v135
    %v137 = vsub.f32 1.0, %v136
    %v138 = vmul.f32 %v135, %v137
    %v139 = vadd.f32 %v135, %v138
    %vm140 = vweird.f32 %v135
    %v141 = vsel %vm140, %v135, %v139
    %v142 = vmul.f32 %v131, %v141
    %v143 = vmul.f32 %v134, %v141
    %v144 = vsub.f32 %v124, %v142
    %v145 = vsub.f32 %v125, %v143
    %v146 = vmul.f32 %v144, %v144
    %v147 = vmul.f32 %v145, %v145
    %v148 = vsel %vm128, %v146, 0.0
    %149 = vadd.xlane.f32.xlu0 %v148
    %v150 = vpop.xlane.xlu0 %149
    %v151 = vsel %vm128, %v147, 0.0
    %152 = vadd.xlane.f32.xlu0 %v151
    %v153 = vpop.xlane.xlu0 %152
    %v154 = vmul.f32 %v150, %v141
    %v155 = vmul.f32 %v153, %v141
    %v156 = vadd.f32 %v154, 1e-12
    %v157 = vadd.f32 %v155, 1e-12
    %v158 = vrsqrt.pop %v156
    %v159 = vmul.f32 %v158, %v156
    %v160 = vmul.f32 %v159, %v158
    %v161 = vmul.f32 0.5, %v160
    %v162 = vsub.f32 1.5, %v161
    %v163 = vmul.f32 %v158, %v162
    %vm164 = vweird.f32 %v156
    %vm165 = vweird.f32 %v158
    %vm166 = vmor %vm164, %vm165
    %v167 = vsel %vm166, %v158, %v163
    %v168 = vrsqrt.pop %v157
    %v169 = vmul.f32 %v168, %v157
    %v170 = vmul.f32 %v169, %v168
    %v171 = vmul.f32 0.5, %v170
    %v172 = vsub.f32 1.5, %v171
    %v173 = vmul.f32 %v168, %v172
    %vm174 = vweird.f32 %v157
    %vm175 = vweird.f32 %v168
    %vm176 = vmor %vm174, %vm175
    %v177 = vsel %vm176, %v168, %v173
    %v178 = vmul.f32 %v144, %v167
    %v179 = vmul.f32 %v145, %v177
    %v180 = vperm.slane %v126, 0
    %v181 = vmul.f32 %v178, %v180
    %v182 = vmul.f32 %v179, %v180
    %v183 = vperm.slane %v127, 0
    %v184 = vadd.f32 %v181, %v183
    %v185 = vadd.f32 %v182, %v183
    %v186 = vsub.f32 1.0, %v24
    %v187 = vmul.f32 %v186, -1e+09
    %v189 = vrot.slane %v187, 6
    %vm191 = vcmask 1041408
    %v192 = vsel %vm191, %v187, %v189
    %v194 = vrot.slane %v192, 1
    %v195 = vrot.slane %v192, 2
    %v196 = vrot.slane %v192, 3
    %v197 = vld [vmem:[%s2 + $0x60] sm:$0xff]
    %v198 = vld [vmem:[%s2 + $0x68] sm:$0xff]
    %v199 = vld [vmem:[%s2 + $0x70] sm:$0xff]
    %v200 = vld [vmem:[%s2 + $0x78] sm:$0xff]
    %v201 = vpack.c.bf16 %v185, %v184
    %v202 = vld [vmem:[%s1 + $0x2] sm:$0x1]
    %v203 = vperm.slane %v202, 0
    %v208 = vunpack.c.l.b16 %v197
    %v209 = vunpack.c.l.b16 %v198
    %v210 = vunpack.c.l.b16 %v199
    %v211 = vunpack.c.l.b16 %v200
    %v212 = vpack.c.b16 %v209, %v208
    %v213 = vpack.c.b16 %v211, %v210
    %v217 = vsel %vm128, %v201, 0
    %219 = vmatpush.bf16.msra.mxu0 0
    %220 = vmatpush.bf16.msra.mxu0 0
    %221 = vmatpush.bf16.msra.mxu0 0
    %222 = vmatpush.bf16.msra.mxu0 0
    %223 = vmatpush.bf16.msra.mxu0 0
    %224 = vmatpush.bf16.msra.mxu0 0
    %225 = vmatpush.bf16.msra.mxu0 %v213
    %226 = vmatpush.bf16.msra.mxu0 %v212
    %227 = vmatmul.bf16.gmra.mxu0 %v217
    %v228 = vpop.f32.mrf.mxu0
    %v229 = vadd.f32 %v203, %v228
    %v230 = vpop.f32.mrf.mxu0
    %v231 = vadd.f32 %v203, %v230
    %232 = vdwg.mxu0
    %235 = vrot.lane.b32.xlu0 %v229, 112
    %v236 = vpop.permute.xlu0 %235
    %237 = vrot.lane.b32.xlu0 %v231, 112
    %v238 = vpop.permute.xlu0 %237
    %v241 = vpack.c.bf16 %v229, %v229
    %v242 = vpack.c.bf16 %v231, %v231
    %v243 = vpack.c.bf16 %v236, %v236
    %v244 = vpack.c.bf16 %v238, %v238
    %v246 = vunpack.c.l.b16 %v241
    %v247 = vpack.c.b16 %v246, %v246
    %248 = vrot.lane.b32.xlu0 %v247, 96
    %v249 = vpop.permute.xlu0 %248
    %vm250 = vcmask 130048
    %v252 = vsel %vm250, %v241, 0
    %v255 = vsel %vm250, %v249, 0
    %257 = vmatpush.bf16.xpose.msra.mxu0 0
    %258 = vmatpush.bf16.xpose.msra.mxu0 0
    %259 = vmatpush.bf16.xpose.msra.mxu0 0
    %260 = vmatpush.bf16.xpose.msra.mxu0 0
    %261 = vmatpush.bf16.xpose.msra.mxu0 0
    %262 = vmatpush.bf16.xpose.msra.mxu0 0
    %263 = vmatpush.bf16.xpose.msra.mxu0 0
    %264 = vmatpush.bf16.xpose.msra.mxu0 %v255
    %265 = vmatmul.bf16.gmra.mxu0 %v252
    %v266 = vpop.f32.mrf.mxu0
    %v267 = vadd.f32 0.0, %v266
    %v268 = vpop.f32.mrf.mxu0
    %269 = vdwg.mxu0
    %v271 = vunpack.c.l.b16 %v242
    %v272 = vpack.c.b16 %v271, %v271
    %273 = vrot.lane.b32.xlu0 %v272, 96
    %v274 = vpop.permute.xlu0 %273
    %v276 = vsel %vm250, %v242, 0
    %v279 = vsel %vm250, %v274, 0
    %281 = vmatpush.bf16.xpose.msra.mxu0 0
    %282 = vmatpush.bf16.xpose.msra.mxu0 0
    %283 = vmatpush.bf16.xpose.msra.mxu0 0
    %284 = vmatpush.bf16.xpose.msra.mxu0 0
    %285 = vmatpush.bf16.xpose.msra.mxu0 0
    %286 = vmatpush.bf16.xpose.msra.mxu0 0
    %287 = vmatpush.bf16.xpose.msra.mxu0 0
    %288 = vmatpush.bf16.xpose.msra.mxu0 %v279
    %289 = vmatmul.bf16.gmra.mxu0 %v276
    %v290 = vpop.f32.mrf.mxu0
    %v291 = vadd.f32 0.0, %v290
    %v292 = vpop.f32.mrf.mxu0
    %293 = vdwg.mxu0
    %v295 = vunpack.c.l.b16 %v243
    %v296 = vpack.c.b16 %v295, %v295
    %297 = vrot.lane.b32.xlu0 %v296, 96
    %v298 = vpop.permute.xlu0 %297
    %v300 = vsel %vm250, %v243, 0
    %v303 = vsel %vm250, %v298, 0
    %305 = vmatpush.bf16.xpose.msra.mxu0 0
    %306 = vmatpush.bf16.xpose.msra.mxu0 0
    %307 = vmatpush.bf16.xpose.msra.mxu0 0
    %308 = vmatpush.bf16.xpose.msra.mxu0 0
    %309 = vmatpush.bf16.xpose.msra.mxu0 0
    %310 = vmatpush.bf16.xpose.msra.mxu0 0
    %311 = vmatpush.bf16.xpose.msra.mxu0 0
    %312 = vmatpush.bf16.xpose.msra.mxu0 %v303
    %313 = vmatmul.bf16.gmra.mxu0 %v300
    %v314 = vpop.f32.mrf.mxu0
    %v315 = vadd.f32 0.0, %v314
    %v316 = vpop.f32.mrf.mxu0
    %317 = vdwg.mxu0
    %v319 = vunpack.c.l.b16 %v244
    %v320 = vpack.c.b16 %v319, %v319
    %321 = vrot.lane.b32.xlu0 %v320, 96
    %v322 = vpop.permute.xlu0 %321
    %v324 = vsel %vm250, %v244, 0
    %v327 = vsel %vm250, %v322, 0
    %329 = vmatpush.bf16.xpose.msra.mxu0 0
    %330 = vmatpush.bf16.xpose.msra.mxu0 0
    %331 = vmatpush.bf16.xpose.msra.mxu0 0
    %332 = vmatpush.bf16.xpose.msra.mxu0 0
    %333 = vmatpush.bf16.xpose.msra.mxu0 0
    %334 = vmatpush.bf16.xpose.msra.mxu0 0
    %335 = vmatpush.bf16.xpose.msra.mxu0 0
    %336 = vmatpush.bf16.xpose.msra.mxu0 %v327
    %337 = vmatmul.bf16.gmra.mxu0 %v324
    %v338 = vpop.f32.mrf.mxu0
    %v339 = vadd.f32 0.0, %v338
    %v340 = vpop.f32.mrf.mxu0
    %341 = vdwg.mxu0
    %v342 = vmul.f32 %v267, 0.25
    %v343 = vmul.f32 %v291, 0.25
    %v344 = vmul.f32 %v315, 0.25
    %v345 = vmul.f32 %v339, 0.25
    %v346 = vperm.slane %v192, 0
    %v347 = vperm.slane %v194, 0
    %v348 = vperm.slane %v195, 0
    %v349 = vperm.slane %v196, 0
    %350 = vrot.lane.b32.xlu0 %v346, 120
    %v351 = vpop.permute.xlu0 %350
    %352 = vrot.lane.b32.xlu0 %v347, 120
    %v353 = vpop.permute.xlu0 %352
    %354 = vrot.lane.b32.xlu0 %v348, 120
    %v355 = vpop.permute.xlu0 %354
    %356 = vrot.lane.b32.xlu0 %v349, 120
    %v357 = vpop.permute.xlu0 %356
    %v362 = vadd.f32 %v342, %v351
    %v363 = vadd.f32 %v343, %v353
    %v364 = vadd.f32 %v344, %v355
    %v365 = vadd.f32 %v345, %v357
    %vm366 = vcmask 64512
    %v367 = vsel %vm366, %v362, -inf
    %368 = vmax.xlane.f32.xlu0 %v367
    %v369 = vpop.xlane.xlu0 %368
    %v370 = vsel %vm366, %v363, -inf
    %371 = vmax.xlane.f32.xlu0 %v370
    %v372 = vpop.xlane.xlu0 %371
    %v373 = vsel %vm366, %v364, -inf
    %374 = vmax.xlane.f32.xlu0 %v373
    %v375 = vpop.xlane.xlu0 %374
    %v376 = vsel %vm366, %v365, -inf
    %377 = vmax.xlane.f32.xlu0 %v376
    %v378 = vpop.xlane.xlu0 %377
    %v379 = vsub.f32 %v362, %v369
    %v380 = vsub.f32 %v363, %v372
    %v381 = vsub.f32 %v364, %v375
    %v382 = vsub.f32 %v365, %v378
    %v383 = vmul.f32 %v379, 1.442695
    %v384 = vpow.pop %v383
    %v385 = vmul.f32 %v380, 1.442695
    %v386 = vpow.pop %v385
    %v387 = vmul.f32 %v381, 1.442695
    %v388 = vpow.pop %v387
    %v389 = vmul.f32 %v382, 1.442695
    %v390 = vpow.pop %v389
    %v391 = vsel %vm366, %v384, 0.0
    %392 = vadd.xlane.f32.xlu0 %v391
    %v393 = vpop.xlane.xlu0 %392
    %v394 = vsel %vm366, %v386, 0.0
    %395 = vadd.xlane.f32.xlu0 %v394
    %v396 = vpop.xlane.xlu0 %395
    %v397 = vsel %vm366, %v388, 0.0
    %398 = vadd.xlane.f32.xlu0 %v397
    %v399 = vpop.xlane.xlu0 %398
    %v400 = vsel %vm366, %v390, 0.0
    %401 = vadd.xlane.f32.xlu0 %v400
    %v402 = vpop.xlane.xlu0 %401
    %v403 = vrcp.pop %v393
    %v404 = vmul.f32 %v393, %v403
    %v405 = vsub.f32 1.0, %v404
    %v406 = vmul.f32 %v403, %v405
    %v407 = vadd.f32 %v403, %v406
    %vm408 = vweird.f32 %v393
    %vm409 = vweird.f32 %v403
    %vm410 = vmor %vm408, %vm409
    %v411 = vsel %vm410, %v403, %v407
    %v412 = vand.u32 2147483647, %v393
    %vm413 = vcmp.eq.f32.partialorder %v412, 8.507059e+37
    %v414 = vand.u32 %v393, 2147483648
    %v415 = vor.u32 1.1754944e-38, %v414
    %v416 = vsel %vm413, %v415, %v411
    %v417 = vmul.f32 %v384, %v416
    %v418 = vrcp.pop %v396
    %v419 = vmul.f32 %v396, %v418
    %v420 = vsub.f32 1.0, %v419
    %v421 = vmul.f32 %v418, %v420
    %v422 = vadd.f32 %v418, %v421
    %vm423 = vweird.f32 %v396
    %vm424 = vweird.f32 %v418
    %vm425 = vmor %vm423, %vm424
    %v426 = vsel %vm425, %v418, %v422
    %v427 = vand.u32 2147483647, %v396
    %vm428 = vcmp.eq.f32.partialorder %v427, 8.507059e+37
    %v429 = vand.u32 %v396, 2147483648
    %v430 = vor.u32 1.1754944e-38, %v429
    %v431 = vsel %vm428, %v430, %v426
    %v432 = vmul.f32 %v386, %v431
    %v433 = vrcp.pop %v399
    %v434 = vmul.f32 %v399, %v433
    %v435 = vsub.f32 1.0, %v434
    %v436 = vmul.f32 %v433, %v435
    %v437 = vadd.f32 %v433, %v436
    %vm438 = vweird.f32 %v399
    %vm439 = vweird.f32 %v433
    %vm440 = vmor %vm438, %vm439
    %v441 = vsel %vm440, %v433, %v437
    %v442 = vand.u32 2147483647, %v399
    %vm443 = vcmp.eq.f32.partialorder %v442, 8.507059e+37
    %v444 = vand.u32 %v399, 2147483648
    %v445 = vor.u32 1.1754944e-38, %v444
    %v446 = vsel %vm443, %v445, %v441
    %v447 = vmul.f32 %v388, %v446
    %v448 = vrcp.pop %v402
    %v449 = vmul.f32 %v402, %v448
    %v450 = vsub.f32 1.0, %v449
    %v451 = vmul.f32 %v448, %v450
    %v452 = vadd.f32 %v448, %v451
    %vm453 = vweird.f32 %v402
    %vm454 = vweird.f32 %v448
    %vm455 = vmor %vm453, %vm454
    %v456 = vsel %vm455, %v448, %v452
    %v457 = vand.u32 2147483647, %v402
    %vm458 = vcmp.eq.f32.partialorder %v457, 8.507059e+37
    %v459 = vand.u32 %v402, 2147483648
    %v460 = vor.u32 1.1754944e-38, %v459
    %v461 = vsel %vm458, %v460, %v456
    %v462 = vmul.f32 %v390, %v461
    %v463 = vpack.c.bf16 %v417, %v417
    %v464 = vpack.c.bf16 %v432, %v432
    %v465 = vpack.c.bf16 %v447, %v447
    %v466 = vpack.c.bf16 %v462, %v462
    %467 = vrot.lane.b32.xlu0 %v247, 64
    %v468 = vpop.permute.xlu0 %467
    %v470 = vsel %vm366, %v463, 0
    %vm472 = vcmask 1043456
    %v474 = vsel %vm472, %v468, 0
    %476 = vmatpush.bf16.msra.mxu0 0
    %477 = vmatpush.bf16.msra.mxu0 0
    %478 = vmatpush.bf16.msra.mxu0 0
    %479 = vmatpush.bf16.msra.mxu0 0
    %480 = vmatpush.bf16.msra.mxu0 0
    %481 = vmatpush.bf16.msra.mxu0 0
    %482 = vmatpush.bf16.msra.mxu0 0
    %483 = vmatpush.bf16.msra.mxu0 %v474
    %484 = vmatmul.bf16.gmra.mxu0 %v470
    %v485 = vpop.f32.mrf.mxu0
    %v486 = vadd.f32 0.0, %v485
    %v487 = vpop.f32.mrf.mxu0
    %488 = vdwg.mxu0
    %489 = vrot.lane.b32.xlu0 %v272, 64
    %v490 = vpop.permute.xlu0 %489
    %v492 = vsel %vm366, %v464, 0
    %v495 = vsel %vm472, %v490, 0
    %497 = vmatpush.bf16.msra.mxu0 0
    %498 = vmatpush.bf16.msra.mxu0 0
    %499 = vmatpush.bf16.msra.mxu0 0
    %500 = vmatpush.bf16.msra.mxu0 0
    %501 = vmatpush.bf16.msra.mxu0 0
    %502 = vmatpush.bf16.msra.mxu0 0
    %503 = vmatpush.bf16.msra.mxu0 0
    %504 = vmatpush.bf16.msra.mxu0 %v495
    %505 = vmatmul.bf16.gmra.mxu0 %v492
    %v506 = vpop.f32.mrf.mxu0
    %v507 = vadd.f32 0.0, %v506
    %v508 = vpop.f32.mrf.mxu0
    %509 = vdwg.mxu0
    %510 = vrot.lane.b32.xlu0 %v296, 64
    %v511 = vpop.permute.xlu0 %510
    %v513 = vsel %vm366, %v465, 0
    %v516 = vsel %vm472, %v511, 0
    %518 = vmatpush.bf16.msra.mxu0 0
    %519 = vmatpush.bf16.msra.mxu0 0
    %520 = vmatpush.bf16.msra.mxu0 0
    %521 = vmatpush.bf16.msra.mxu0 0
    %522 = vmatpush.bf16.msra.mxu0 0
    %523 = vmatpush.bf16.msra.mxu0 0
    %524 = vmatpush.bf16.msra.mxu0 0
    %525 = vmatpush.bf16.msra.mxu0 %v516
    %526 = vmatmul.bf16.gmra.mxu0 %v513
    %v527 = vpop.f32.mrf.mxu0
    %v528 = vadd.f32 0.0, %v527
    %v529 = vpop.f32.mrf.mxu0
    %530 = vdwg.mxu0
    %531 = vrot.lane.b32.xlu0 %v320, 64
    %v532 = vpop.permute.xlu0 %531
    %v534 = vsel %vm366, %v466, 0
    %v537 = vsel %vm472, %v532, 0
    %539 = vmatpush.bf16.msra.mxu0 0
    %540 = vmatpush.bf16.msra.mxu0 0
    %541 = vmatpush.bf16.msra.mxu0 0
    %542 = vmatpush.bf16.msra.mxu0 0
    %543 = vmatpush.bf16.msra.mxu0 0
    %544 = vmatpush.bf16.msra.mxu0 0
    %545 = vmatpush.bf16.msra.mxu0 0
    %546 = vmatpush.bf16.msra.mxu0 %v537
    %547 = vmatmul.bf16.gmra.mxu0 %v534
    %v548 = vpop.f32.mrf.mxu0
    %v549 = vadd.f32 0.0, %v548
    %v550 = vpop.f32.mrf.mxu0
    %551 = vdwg.mxu0
    %v552 = vld [vmem:[%s1 + $0x3] sm:$0x1]
    %v553 = vpack.c.bf16 %v507, %v486
    %554 = vrot.lane.b32.xlu0 %v212, 32
    %v555 = vpop.permute.xlu0 %554
    %v558 = vsel %vm250, %v553, 0
    %560 = vmatpush.bf16.msra.mxu0 0
    %561 = vmatpush.bf16.msra.mxu0 0
    %562 = vmatpush.bf16.msra.mxu0 0
    %563 = vmatpush.bf16.msra.mxu0 0
    %564 = vmatpush.bf16.msra.mxu0 0
    %565 = vmatpush.bf16.msra.mxu0 0
    %566 = vmatpush.bf16.msra.mxu0 0
    %567 = vmatpush.bf16.msra.mxu0 %v555
    %568 = vmatmul.bf16.gmra.mxu0 %v558
    %v569 = vpop.f32.mrf.mxu0
    %v570 = vadd.f32 0.0, %v569
    %v571 = vpop.f32.mrf.mxu0
    %v572 = vadd.f32 0.0, %v571
    %573 = vdwg.mxu0
    %v574 = vperm.slane %v552, 0
    %v575 = vadd.f32 %v574, %v570
    %v576 = vadd.f32 %v574, %v572
    %v577 = vpack.c.bf16 %v549, %v528
    %578 = vrot.lane.b32.xlu0 %v213, 32
    %v579 = vpop.permute.xlu0 %578
    %v582 = vsel %vm250, %v577, 0
    %584 = vmatpush.bf16.msra.mxu0 0
    %585 = vmatpush.bf16.msra.mxu0 0
    %586 = vmatpush.bf16.msra.mxu0 0
    %587 = vmatpush.bf16.msra.mxu0 0
    %588 = vmatpush.bf16.msra.mxu0 0
    %589 = vmatpush.bf16.msra.mxu0 0
    %590 = vmatpush.bf16.msra.mxu0 0
    %591 = vmatpush.bf16.msra.mxu0 %v579
    %592 = vmatmul.bf16.gmra.mxu0 %v582
    %v593 = vpop.f32.mrf.mxu0
    %v594 = vadd.f32 0.0, %v593
    %v595 = vpop.f32.mrf.mxu0
    %v596 = vadd.f32 0.0, %v595
    %597 = vdwg.mxu0
    %v598 = vadd.f32 %v575, %v594
    %v599 = vadd.f32 %v576, %v596
    %v600 = vadd.f32 %v184, %v598
    %v601 = vadd.f32 %v185, %v599
    %v602 = vld [vmem:[%s1 + $0x4] sm:$0x1]
    %v603 = vld [vmem:[%s1 + $0x5] sm:$0x1]
    %v604 = vsel %vm128, %v600, 0.0
    %605 = vadd.xlane.f32.xlu0 %v604
    %v606 = vpop.xlane.xlu0 %605
    %v607 = vsel %vm128, %v601, 0.0
    %608 = vadd.xlane.f32.xlu0 %v607
    %v609 = vpop.xlane.xlu0 %608
    %v610 = vmul.f32 %v606, %v141
    %v611 = vmul.f32 %v609, %v141
    %v612 = vsub.f32 %v600, %v610
    %v613 = vsub.f32 %v601, %v611
    %v614 = vmul.f32 %v612, %v612
    %v615 = vmul.f32 %v613, %v613
    %v616 = vsel %vm128, %v614, 0.0
    %617 = vadd.xlane.f32.xlu0 %v616
    %v618 = vpop.xlane.xlu0 %617
    %v619 = vsel %vm128, %v615, 0.0
    %620 = vadd.xlane.f32.xlu0 %v619
    %v621 = vpop.xlane.xlu0 %620
    %v622 = vmul.f32 %v618, %v141
    %v623 = vmul.f32 %v621, %v141
    %v624 = vadd.f32 %v622, 1e-12
    %v625 = vadd.f32 %v623, 1e-12
    %v626 = vrsqrt.pop %v624
    %v627 = vmul.f32 %v626, %v624
    %v628 = vmul.f32 %v627, %v626
    %v629 = vmul.f32 0.5, %v628
    %v630 = vsub.f32 1.5, %v629
    %v631 = vmul.f32 %v626, %v630
    %vm632 = vweird.f32 %v624
    %vm633 = vweird.f32 %v626
    %vm634 = vmor %vm632, %vm633
    %v635 = vsel %vm634, %v626, %v631
    %v636 = vrsqrt.pop %v625
    %v637 = vmul.f32 %v636, %v625
    %v638 = vmul.f32 %v637, %v636
    %v639 = vmul.f32 0.5, %v638
    %v640 = vsub.f32 1.5, %v639
    %v641 = vmul.f32 %v636, %v640
    %vm642 = vweird.f32 %v625
    %vm643 = vweird.f32 %v636
    %vm644 = vmor %vm642, %vm643
    %v645 = vsel %vm644, %v636, %v641
    %v646 = vmul.f32 %v612, %v635
    %v647 = vmul.f32 %v613, %v645
    %v648 = vperm.slane %v602, 0
    %v649 = vmul.f32 %v646, %v648
    %v650 = vmul.f32 %v647, %v648
    %v651 = vperm.slane %v603, 0
    %v652 = vadd.f32 %v649, %v651
    %v653 = vadd.f32 %v650, %v651
    %v654 = vpack.c.bf16 %v653, %v652
    %v655 = vld [vmem:[%s1 + $0x6] sm:$0x1]
    %v656 = vperm.slane %v655, 0
    %v657 = vunpack.c.h.b16 %v197
    %v658 = vunpack.c.h.b16 %v198
    %v659 = vunpack.c.h.b16 %v199
    %v660 = vunpack.c.h.b16 %v200
    %v661 = vpack.c.b16 %v658, %v657
    %v662 = vpack.c.b16 %v660, %v659
    %v666 = vsel %vm128, %v654, 0
    %668 = vmatpush.bf16.msra.mxu0 0
    %669 = vmatpush.bf16.msra.mxu0 0
    %670 = vmatpush.bf16.msra.mxu0 0
    %671 = vmatpush.bf16.msra.mxu0 0
    %672 = vmatpush.bf16.msra.mxu0 0
    %673 = vmatpush.bf16.msra.mxu0 0
    %674 = vmatpush.bf16.msra.mxu0 %v662
    %675 = vmatpush.bf16.msra.mxu0 %v661
    %676 = vmatmul.bf16.gmra.mxu0 %v666
    %v677 = vpop.f32.mrf.mxu0
    %v678 = vadd.f32 %v656, %v677
    %v679 = vpop.f32.mrf.mxu0
    %v680 = vadd.f32 %v656, %v679
    %681 = vdwg.mxu0
    %v682 = vmul.f32 %v678, %v678
    %v683 = vmul.f32 %v680, %v680
    %v684 = vmul.f32 %v678, %v682
    %v685 = vmul.f32 %v680, %v683
    %v686 = vmul.f32 %v684, 0.044715
    %v687 = vmul.f32 %v685, 0.044715
    %v688 = vadd.f32 %v678, %v686
    %v689 = vadd.f32 %v680, %v687
    %v690 = vmul.f32 %v688, 0.7978846
    %v691 = vmul.f32 %v689, 0.7978846
    %v692 = vtanh.pop %v690
    %v693 = vtanh.pop %v691
    %v694 = vadd.f32 %v692, 1.0
    %v695 = vadd.f32 %v693, 1.0
    %v696 = vmul.f32 %v694, 0.5
    %v697 = vmul.f32 %v695, 0.5
    %v698 = vmul.f32 %v678, %v696
    %v699 = vmul.f32 %v680, %v697
    %v700 = vpack.c.bf16 %v699, %v698
    %v701 = vld [vmem:[%s2 + $0xa0] sm:$0xf]
    %v702 = vld [vmem:[%s2 + $0xa8] sm:$0xf]
    %v703 = vld [vmem:[%s2 + $0xb0] sm:$0xf]
    %v704 = vld [vmem:[%s2 + $0xb8] sm:$0xf]
    %v705 = vld [vmem:[%s2 + $0xc0] sm:$0xf]
    %v706 = vld [vmem:[%s2 + $0xc8] sm:$0xf]
    %v707 = vld [vmem:[%s2 + $0xd0] sm:$0xf]
    %v708 = vld [vmem:[%s2 + $0xd8] sm:$0xf]
    %v709 = vld [vmem:[%s1 + $0x7] sm:$0x1]
    %v710 = vperm.slane %v709, 0
    %v719 = vunpack.c.l.b16 %v701
    %v720 = vunpack.c.l.b16 %v702
    %v721 = vunpack.c.l.b16 %v703
    %v722 = vunpack.c.l.b16 %v704
    %v723 = vunpack.c.l.b16 %v705
    %v724 = vunpack.c.l.b16 %v706
    %v725 = vunpack.c.l.b16 %v707
    %v726 = vunpack.c.l.b16 %v708
    %v727 = vpack.c.b16 %v720, %v719
    %v728 = vpack.c.b16 %v722, %v721
    %v729 = vpack.c.b16 %v724, %v723
    %v730 = vpack.c.b16 %v726, %v725
    %v736 = vsel %vm106, %v700, 0
    %738 = vmatpush.bf16.msra.mxu0 0
    %739 = vmatpush.bf16.msra.mxu0 0
    %740 = vmatpush.bf16.msra.mxu0 0
    %741 = vmatpush.bf16.msra.mxu0 0
    %742 = vmatpush.bf16.msra.mxu0 %v730
    %743 = vmatpush.bf16.msra.mxu0 %v729
    %744 = vmatpush.bf16.msra.mxu0 %v728
    %745 = vmatpush.bf16.msra.mxu0 %v727
    %746 = vmatmul.bf16.gmra.mxu0 %v736
    %v747 = vpop.f32.mrf.mxu0
    %v748 = vadd.f32 %v710, %v747
    %v749 = vpop.f32.mrf.mxu0
    %v750 = vadd.f32 %v710, %v749
    %751 = vdwg.mxu0
    %v752 = vadd.f32 %v652, %v748
    %v753 = vadd.f32 %v653, %v750
    %v754 = vld [vmem:[%s1 + $0x8] sm:$0x1]
    %v755 = vld [vmem:[%s1 + $0x9] sm:$0x1]
    %v756 = vsel %vm128, %v752, 0.0
    %757 = vadd.xlane.f32.xlu0 %v756
    %v758 = vpop.xlane.xlu0 %757
    %v759 = vsel %vm128, %v753, 0.0
    %760 = vadd.xlane.f32.xlu0 %v759
    %v761 = vpop.xlane.xlu0 %760
    %v762 = vmul.f32 %v758, %v141
    %v763 = vmul.f32 %v761, %v141
    %v764 = vsub.f32 %v752, %v762
    %v765 = vsub.f32 %v753, %v763
    %v766 = vmul.f32 %v764, %v764
    %v767 = vmul.f32 %v765, %v765
    %v768 = vsel %vm128, %v766, 0.0
    %769 = vadd.xlane.f32.xlu0 %v768
    %v770 = vpop.xlane.xlu0 %769
    %v771 = vsel %vm128, %v767, 0.0
    %772 = vadd.xlane.f32.xlu0 %v771
    %v773 = vpop.xlane.xlu0 %772
    %v774 = vmul.f32 %v770, %v141
    %v775 = vmul.f32 %v773, %v141
    %v776 = vadd.f32 %v774, 1e-12
    %v777 = vadd.f32 %v775, 1e-12
    %v778 = vrsqrt.pop %v776
    %v779 = vmul.f32 %v778, %v776
    %v780 = vmul.f32 %v779, %v778
    %v781 = vmul.f32 0.5, %v780
    %v782 = vsub.f32 1.5, %v781
    %v783 = vmul.f32 %v778, %v782
    %vm784 = vweird.f32 %v776
    %vm785 = vweird.f32 %v778
    %vm786 = vmor %vm784, %vm785
    %v787 = vsel %vm786, %v778, %v783
    %v788 = vrsqrt.pop %v777
    %v789 = vmul.f32 %v788, %v777
    %v790 = vmul.f32 %v789, %v788
    %v791 = vmul.f32 0.5, %v790
    %v792 = vsub.f32 1.5, %v791
    %v793 = vmul.f32 %v788, %v792
    %vm794 = vweird.f32 %v777
    %vm795 = vweird.f32 %v788
    %vm796 = vmor %vm794, %vm795
    %v797 = vsel %vm796, %v788, %v793
    %v798 = vmul.f32 %v764, %v787
    %v799 = vmul.f32 %v765, %v797
    %v800 = vperm.slane %v754, 0
    %v801 = vmul.f32 %v798, %v800
    %v802 = vmul.f32 %v799, %v800
    %v803 = vperm.slane %v755, 0
    %v804 = vadd.f32 %v801, %v803
    %v805 = vadd.f32 %v802, %v803
    %v806 = vld [vmem:[%s2 + $0x80] sm:$0xff]
    %v807 = vld [vmem:[%s2 + $0x88] sm:$0xff]
    %v808 = vld [vmem:[%s2 + $0x90] sm:$0xff]
    %v809 = vld [vmem:[%s2 + $0x98] sm:$0xff]
    %v810 = vpack.c.bf16 %v805, %v804
    %v811 = vld [vmem:[%s1 + $0xa] sm:$0x1]
    %v812 = vperm.slane %v811, 0
    %v817 = vunpack.c.l.b16 %v806
    %v818 = vunpack.c.l.b16 %v807
    %v819 = vunpack.c.l.b16 %v808
    %v820 = vunpack.c.l.b16 %v809
    %v821 = vpack.c.b16 %v818, %v817
    %v822 = vpack.c.b16 %v820, %v819
    %v826 = vsel %vm128, %v810, 0
    %828 = vmatpush.bf16.msra.mxu0 0
    %829 = vmatpush.bf16.msra.mxu0 0
    %830 = vmatpush.bf16.msra.mxu0 0
    %831 = vmatpush.bf16.msra.mxu0 0
    %832 = vmatpush.bf16.msra.mxu0 0
    %833 = vmatpush.bf16.msra.mxu0 0
    %834 = vmatpush.bf16.msra.mxu0 %v822
    %835 = vmatpush.bf16.msra.mxu0 %v821
    %836 = vmatmul.bf16.gmra.mxu0 %v826
    %v837 = vpop.f32.mrf.mxu0
    %v838 = vadd.f32 %v812, %v837
    %v839 = vpop.f32.mrf.mxu0
    %v840 = vadd.f32 %v812, %v839
    %841 = vdwg.mxu0
    %844 = vrot.lane.b32.xlu0 %v838, 112
    %v845 = vpop.permute.xlu0 %844
    %846 = vrot.lane.b32.xlu0 %v840, 112
    %v847 = vpop.permute.xlu0 %846
    %v850 = vpack.c.bf16 %v838, %v838
    %v851 = vpack.c.bf16 %v840, %v840
    %v852 = vpack.c.bf16 %v845, %v845
    %v853 = vpack.c.bf16 %v847, %v847
    %v855 = vunpack.c.l.b16 %v850
    %v856 = vpack.c.b16 %v855, %v855
    %857 = vrot.lane.b32.xlu0 %v856, 96
    %v858 = vpop.permute.xlu0 %857
    %v860 = vsel %vm250, %v850, 0
    %v863 = vsel %vm250, %v858, 0
    %865 = vmatpush.bf16.xpose.msra.mxu0 0
    %866 = vmatpush.bf16.xpose.msra.mxu0 0
    %867 = vmatpush.bf16.xpose.msra.mxu0 0
    %868 = vmatpush.bf16.xpose.msra.mxu0 0
    %869 = vmatpush.bf16.xpose.msra.mxu0 0
    %870 = vmatpush.bf16.xpose.msra.mxu0 0
    %871 = vmatpush.bf16.xpose.msra.mxu0 0
    %872 = vmatpush.bf16.xpose.msra.mxu0 %v863
    %873 = vmatmul.bf16.gmra.mxu0 %v860
    %v874 = vpop.f32.mrf.mxu0
    %v875 = vadd.f32 0.0, %v874
    %v876 = vpop.f32.mrf.mxu0
    %877 = vdwg.mxu0
    %v879 = vunpack.c.l.b16 %v851
    %v880 = vpack.c.b16 %v879, %v879
    %881 = vrot.lane.b32.xlu0 %v880, 96
    %v882 = vpop.permute.xlu0 %881
    %v884 = vsel %vm250, %v851, 0
    %v887 = vsel %vm250, %v882, 0
    %889 = vmatpush.bf16.xpose.msra.mxu0 0
    %890 = vmatpush.bf16.xpose.msra.mxu0 0
    %891 = vmatpush.bf16.xpose.msra.mxu0 0
    %892 = vmatpush.bf16.xpose.msra.mxu0 0
    %893 = vmatpush.bf16.xpose.msra.mxu0 0
    %894 = vmatpush.bf16.xpose.msra.mxu0 0
    %895 = vmatpush.bf16.xpose.msra.mxu0 0
    %896 = vmatpush.bf16.xpose.msra.mxu0 %v887
    %897 = vmatmul.bf16.gmra.mxu0 %v884
    %v898 = vpop.f32.mrf.mxu0
    %v899 = vadd.f32 0.0, %v898
    %v900 = vpop.f32.mrf.mxu0
    %901 = vdwg.mxu0
    %v903 = vunpack.c.l.b16 %v852
    %v904 = vpack.c.b16 %v903, %v903
    %905 = vrot.lane.b32.xlu0 %v904, 96
    %v906 = vpop.permute.xlu0 %905
    %v908 = vsel %vm250, %v852, 0
    %v911 = vsel %vm250, %v906, 0
    %913 = vmatpush.bf16.xpose.msra.mxu0 0
    %914 = vmatpush.bf16.xpose.msra.mxu0 0
    %915 = vmatpush.bf16.xpose.msra.mxu0 0
    %916 = vmatpush.bf16.xpose.msra.mxu0 0
    %917 = vmatpush.bf16.xpose.msra.mxu0 0
    %918 = vmatpush.bf16.xpose.msra.mxu0 0
    %919 = vmatpush.bf16.xpose.msra.mxu0 0
    %920 = vmatpush.bf16.xpose.msra.mxu0 %v911
    %921 = vmatmul.bf16.gmra.mxu0 %v908
    %v922 = vpop.f32.mrf.mxu0
    %v923 = vadd.f32 0.0, %v922
    %v924 = vpop.f32.mrf.mxu0
    %925 = vdwg.mxu0
    %v927 = vunpack.c.l.b16 %v853
    %v928 = vpack.c.b16 %v927, %v927
    %929 = vrot.lane.b32.xlu0 %v928, 96
    %v930 = vpop.permute.xlu0 %929
    %v932 = vsel %vm250, %v853, 0
    %v935 = vsel %vm250, %v930, 0
    %937 = vmatpush.bf16.xpose.msra.mxu0 0
    %938 = vmatpush.bf16.xpose.msra.mxu0 0
    %939 = vmatpush.bf16.xpose.msra.mxu0 0
    %940 = vmatpush.bf16.xpose.msra.mxu0 0
    %941 = vmatpush.bf16.xpose.msra.mxu0 0
    %942 = vmatpush.bf16.xpose.msra.mxu0 0
    %943 = vmatpush.bf16.xpose.msra.mxu0 0
    %944 = vmatpush.bf16.xpose.msra.mxu0 %v935
    %945 = vmatmul.bf16.gmra.mxu0 %v932
    %v946 = vpop.f32.mrf.mxu0
    %v947 = vadd.f32 0.0, %v946
    %v948 = vpop.f32.mrf.mxu0
    %949 = vdwg.mxu0
    %v950 = vmul.f32 %v875, 0.25
    %v951 = vmul.f32 %v899, 0.25
    %v952 = vmul.f32 %v923, 0.25
    %v953 = vmul.f32 %v947, 0.25
    %v954 = vadd.f32 %v950, %v351
    %v955 = vadd.f32 %v951, %v353
    %v956 = vadd.f32 %v952, %v355
    %v957 = vadd.f32 %v953, %v357
    %v958 = vsel %vm366, %v954, -inf
    %959 = vmax.xlane.f32.xlu0 %v958
    %v960 = vpop.xlane.xlu0 %959
    %v961 = vsel %vm366, %v955, -inf
    %962 = vmax.xlane.f32.xlu0 %v961
    %v963 = vpop.xlane.xlu0 %962
    %v964 = vsel %vm366, %v956, -inf
    %965 = vmax.xlane.f32.xlu0 %v964
    %v966 = vpop.xlane.xlu0 %965
    %v967 = vsel %vm366, %v957, -inf
    %968 = vmax.xlane.f32.xlu0 %v967
    %v969 = vpop.xlane.xlu0 %968
    %v970 = vsub.f32 %v954, %v960
    %v971 = vsub.f32 %v955, %v963
    %v972 = vsub.f32 %v956, %v966
    %v973 = vsub.f32 %v957, %v969
    %v974 = vmul.f32 %v970, 1.442695
    %v975 = vpow.pop %v974
    %v976 = vmul.f32 %v971, 1.442695
    %v977 = vpow.pop %v976
    %v978 = vmul.f32 %v972, 1.442695
    %v979 = vpow.pop %v978
    %v980 = vmul.f32 %v973, 1.442695
    %v981 = vpow.pop %v980
    %v982 = vsel %vm366, %v975, 0.0
    %983 = vadd.xlane.f32.xlu0 %v982
    %v984 = vpop.xlane.xlu0 %983
    %v985 = vsel %vm366, %v977, 0.0
    %986 = vadd.xlane.f32.xlu0 %v985
    %v987 = vpop.xlane.xlu0 %986
    %v988 = vsel %vm366, %v979, 0.0
    %989 = vadd.xlane.f32.xlu0 %v988
    %v990 = vpop.xlane.xlu0 %989
    %v991 = vsel %vm366, %v981, 0.0
    %992 = vadd.xlane.f32.xlu0 %v991
    %v993 = vpop.xlane.xlu0 %992
    %v994 = vrcp.pop %v984
    %v995 = vmul.f32 %v984, %v994
    %v996 = vsub.f32 1.0, %v995
    %v997 = vmul.f32 %v994, %v996
    %v998 = vadd.f32 %v994, %v997
    %vm999 = vweird.f32 %v984
    %vm1000 = vweird.f32 %v994
    %vm1001 = vmor %vm999, %vm1000
    %v1002 = vsel %vm1001, %v994, %v998
    %v1003 = vand.u32 2147483647, %v984
    %vm1004 = vcmp.eq.f32.partialorder %v1003, 8.507059e+37
    %v1005 = vand.u32 %v984, 2147483648
    %v1006 = vor.u32 1.1754944e-38, %v1005
    %v1007 = vsel %vm1004, %v1006, %v1002
    %v1008 = vmul.f32 %v975, %v1007
    %v1009 = vrcp.pop %v987
    %v1010 = vmul.f32 %v987, %v1009
    %v1011 = vsub.f32 1.0, %v1010
    %v1012 = vmul.f32 %v1009, %v1011
    %v1013 = vadd.f32 %v1009, %v1012
    %vm1014 = vweird.f32 %v987
    %vm1015 = vweird.f32 %v1009
    %vm1016 = vmor %vm1014, %vm1015
    %v1017 = vsel %vm1016, %v1009, %v1013
    %v1018 = vand.u32 2147483647, %v987
    %vm1019 = vcmp.eq.f32.partialorder %v1018, 8.507059e+37
    %v1020 = vand.u32 %v987, 2147483648
    %v1021 = vor.u32 1.1754944e-38, %v1020
    %v1022 = vsel %vm1019, %v1021, %v1017
    %v1023 = vmul.f32 %v977, %v1022
    %v1024 = vrcp.pop %v990
    %v1025 = vmul.f32 %v990, %v1024
    %v1026 = vsub.f32 1.0, %v1025
    %v1027 = vmul.f32 %v1024, %v1026
    %v1028 = vadd.f32 %v1024, %v1027
    %vm1029 = vweird.f32 %v990
    %vm1030 = vweird.f32 %v1024
    %vm1031 = vmor %vm1029, %vm1030
    %v1032 = vsel %vm1031, %v1024, %v1028
    %v1033 = vand.u32 2147483647, %v990
    %vm1034 = vcmp.eq.f32.partialorder %v1033, 8.507059e+37
    %v1035 = vand.u32 %v990, 2147483648
    %v1036 = vor.u32 1.1754944e-38, %v1035
    %v1037 = vsel %vm1034, %v1036, %v1032
    %v1038 = vmul.f32 %v979, %v1037
    %v1039 = vrcp.pop %v993
    %v1040 = vmul.f32 %v993, %v1039
    %v1041 = vsub.f32 1.0, %v1040
    %v1042 = vmul.f32 %v1039, %v1041
    %v1043 = vadd.f32 %v1039, %v1042
    %vm1044 = vweird.f32 %v993
    %vm1045 = vweird.f32 %v1039
    %vm1046 = vmor %vm1044, %vm1045
    %v1047 = vsel %vm1046, %v1039, %v1043
    %v1048 = vand.u32 2147483647, %v993
    %vm1049 = vcmp.eq.f32.partialorder %v1048, 8.507059e+37
    %v1050 = vand.u32 %v993, 2147483648
    %v1051 = vor.u32 1.1754944e-38, %v1050
    %v1052 = vsel %vm1049, %v1051, %v1047
    %v1053 = vmul.f32 %v981, %v1052
    %v1054 = vpack.c.bf16 %v1008, %v1008
    %v1055 = vpack.c.bf16 %v1023, %v1023
    %v1056 = vpack.c.bf16 %v1038, %v1038
    %v1057 = vpack.c.bf16 %v1053, %v1053
    %1058 = vrot.lane.b32.xlu0 %v856, 64
    %v1059 = vpop.permute.xlu0 %1058
    %v1061 = vsel %vm366, %v1054, 0
    %v1064 = vsel %vm472, %v1059, 0
    %1066 = vmatpush.bf16.msra.mxu0 0
    %1067 = vmatpush.bf16.msra.mxu0 0
    %1068 = vmatpush.bf16.msra.mxu0 0
    %1069 = vmatpush.bf16.msra.mxu0 0
    %1070 = vmatpush.bf16.msra.mxu0 0
    %1071 = vmatpush.bf16.msra.mxu0 0
    %1072 = vmatpush.bf16.msra.mxu0 0
    %1073 = vmatpush.bf16.msra.mxu0 %v1064
    %1074 = vmatmul.bf16.gmra.mxu0 %v1061
    %v1075 = vpop.f32.mrf.mxu0
    %v1076 = vadd.f32 0.0, %v1075
    %v1077 = vpop.f32.mrf.mxu0
    %1078 = vdwg.mxu0
    %1079 = vrot.lane.b32.xlu0 %v880, 64
    %v1080 = vpop.permute.xlu0 %1079
    %v1082 = vsel %vm366, %v1055, 0
    %v1085 = vsel %vm472, %v1080, 0
    %1087 = vmatpush.bf16.msra.mxu0 0
    %1088 = vmatpush.bf16.msra.mxu0 0
    %1089 = vmatpush.bf16.msra.mxu0 0
    %1090 = vmatpush.bf16.msra.mxu0 0
    %1091 = vmatpush.bf16.msra.mxu0 0
    %1092 = vmatpush.bf16.msra.mxu0 0
    %1093 = vmatpush.bf16.msra.mxu0 0
    %1094 = vmatpush.bf16.msra.mxu0 %v1085
    %1095 = vmatmul.bf16.gmra.mxu0 %v1082
    %v1096 = vpop.f32.mrf.mxu0
    %v1097 = vadd.f32 0.0, %v1096
    %v1098 = vpop.f32.mrf.mxu0
    %1099 = vdwg.mxu0
    %1100 = vrot.lane.b32.xlu0 %v904, 64
    %v1101 = vpop.permute.xlu0 %1100
    %v1103 = vsel %vm366, %v1056, 0
    %v1106 = vsel %vm472, %v1101, 0
    %1108 = vmatpush.bf16.msra.mxu0 0
    %1109 = vmatpush.bf16.msra.mxu0 0
    %1110 = vmatpush.bf16.msra.mxu0 0
    %1111 = vmatpush.bf16.msra.mxu0 0
    %1112 = vmatpush.bf16.msra.mxu0 0
    %1113 = vmatpush.bf16.msra.mxu0 0
    %1114 = vmatpush.bf16.msra.mxu0 0
    %1115 = vmatpush.bf16.msra.mxu0 %v1106
    %1116 = vmatmul.bf16.gmra.mxu0 %v1103
    %v1117 = vpop.f32.mrf.mxu0
    %v1118 = vadd.f32 0.0, %v1117
    %v1119 = vpop.f32.mrf.mxu0
    %1120 = vdwg.mxu0
    %1121 = vrot.lane.b32.xlu0 %v928, 64
    %v1122 = vpop.permute.xlu0 %1121
    %v1124 = vsel %vm366, %v1057, 0
    %v1127 = vsel %vm472, %v1122, 0
    %1129 = vmatpush.bf16.msra.mxu0 0
    %1130 = vmatpush.bf16.msra.mxu0 0
    %1131 = vmatpush.bf16.msra.mxu0 0
    %1132 = vmatpush.bf16.msra.mxu0 0
    %1133 = vmatpush.bf16.msra.mxu0 0
    %1134 = vmatpush.bf16.msra.mxu0 0
    %1135 = vmatpush.bf16.msra.mxu0 0
    %1136 = vmatpush.bf16.msra.mxu0 %v1127
    %1137 = vmatmul.bf16.gmra.mxu0 %v1124
    %v1138 = vpop.f32.mrf.mxu0
    %v1139 = vadd.f32 0.0, %v1138
    %v1140 = vpop.f32.mrf.mxu0
    %1141 = vdwg.mxu0
    %v1142 = vld [vmem:[%s1 + $0xb] sm:$0x1]
    %v1143 = vpack.c.bf16 %v1097, %v1076
    %1144 = vrot.lane.b32.xlu0 %v821, 32
    %v1145 = vpop.permute.xlu0 %1144
    %v1148 = vsel %vm250, %v1143, 0
    %1150 = vmatpush.bf16.msra.mxu0 0
    %1151 = vmatpush.bf16.msra.mxu0 0
    %1152 = vmatpush.bf16.msra.mxu0 0
    %1153 = vmatpush.bf16.msra.mxu0 0
    %1154 = vmatpush.bf16.msra.mxu0 0
    %1155 = vmatpush.bf16.msra.mxu0 0
    %1156 = vmatpush.bf16.msra.mxu0 0
    %1157 = vmatpush.bf16.msra.mxu0 %v1145
    %1158 = vmatmul.bf16.gmra.mxu0 %v1148
    %v1159 = vpop.f32.mrf.mxu0
    %v1160 = vadd.f32 0.0, %v1159
    %v1161 = vpop.f32.mrf.mxu0
    %v1162 = vadd.f32 0.0, %v1161
    %1163 = vdwg.mxu0
    %v1164 = vperm.slane %v1142, 0
    %v1165 = vadd.f32 %v1164, %v1160
    %v1166 = vadd.f32 %v1164, %v1162
    %v1167 = vpack.c.bf16 %v1139, %v1118
    %1168 = vrot.lane.b32.xlu0 %v822, 32
    %v1169 = vpop.permute.xlu0 %1168
    %v1172 = vsel %vm250, %v1167, 0
    %1174 = vmatpush.bf16.msra.mxu0 0
    %1175 = vmatpush.bf16.msra.mxu0 0
    %1176 = vmatpush.bf16.msra.mxu0 0
    %1177 = vmatpush.bf16.msra.mxu0 0
    %1178 = vmatpush.bf16.msra.mxu0 0
    %1179 = vmatpush.bf16.msra.mxu0 0
    %1180 = vmatpush.bf16.msra.mxu0 0
    %1181 = vmatpush.bf16.msra.mxu0 %v1169
    %1182 = vmatmul.bf16.gmra.mxu0 %v1172
    %v1183 = vpop.f32.mrf.mxu0
    %v1184 = vadd.f32 0.0, %v1183
    %v1185 = vpop.f32.mrf.mxu0
    %v1186 = vadd.f32 0.0, %v1185
    %1187 = vdwg.mxu0
    %v1188 = vadd.f32 %v1165, %v1184
    %v1189 = vadd.f32 %v1166, %v1186
    %v1190 = vadd.f32 %v804, %v1188
    %v1191 = vadd.f32 %v805, %v1189
    %v1192 = vld [vmem:[%s1 + $0xc] sm:$0x1]
    %v1193 = vld [vmem:[%s1 + $0xd] sm:$0x1]
    %v1194 = vsel %vm128, %v1190, 0.0
    %1195 = vadd.xlane.f32.xlu0 %v1194
    %v1196 = vpop.xlane.xlu0 %1195
    %v1197 = vsel %vm128, %v1191, 0.0
    %1198 = vadd.xlane.f32.xlu0 %v1197
    %v1199 = vpop.xlane.xlu0 %1198
    %v1200 = vmul.f32 %v1196, %v141
    %v1201 = vmul.f32 %v1199, %v141
    %v1202 = vsub.f32 %v1190, %v1200
    %v1203 = vsub.f32 %v1191, %v1201
    %v1204 = vmul.f32 %v1202, %v1202
    %v1205 = vmul.f32 %v1203, %v1203
    %v1206 = vsel %vm128, %v1204, 0.0
    %1207 = vadd.xlane.f32.xlu0 %v1206
    %v1208 = vpop.xlane.xlu0 %1207
    %v1209 = vsel %vm128, %v1205, 0.0
    %1210 = vadd.xlane.f32.xlu0 %v1209
    %v1211 = vpop.xlane.xlu0 %1210
    %v1212 = vmul.f32 %v1208, %v141
    %v1213 = vmul.f32 %v1211, %v141
    %v1214 = vadd.f32 %v1212, 1e-12
    %v1215 = vadd.f32 %v1213, 1e-12
    %v1216 = vrsqrt.pop %v1214
    %v1217 = vmul.f32 %v1216, %v1214
    %v1218 = vmul.f32 %v1217, %v1216
    %v1219 = vmul.f32 0.5, %v1218
    %v1220 = vsub.f32 1.5, %v1219
    %v1221 = vmul.f32 %v1216, %v1220
    %vm1222 = vweird.f32 %v1214
    %vm1223 = vweird.f32 %v1216
    %vm1224 = vmor %vm1222, %vm1223
    %v1225 = vsel %vm1224, %v1216, %v1221
    %v1226 = vrsqrt.pop %v1215
    %v1227 = vmul.f32 %v1226, %v1215
    %v1228 = vmul.f32 %v1227, %v1226
    %v1229 = vmul.f32 0.5, %v1228
    %v1230 = vsub.f32 1.5, %v1229
    %v1231 = vmul.f32 %v1226, %v1230
    %vm1232 = vweird.f32 %v1215
    %vm1233 = vweird.f32 %v1226
    %vm1234 = vmor %vm1232, %vm1233
    %v1235 = vsel %vm1234, %v1226, %v1231
    %v1236 = vmul.f32 %v1202, %v1225
    %v1237 = vmul.f32 %v1203, %v1235
    %v1238 = vperm.slane %v1192, 0
    %v1239 = vmul.f32 %v1236, %v1238
    %v1240 = vmul.f32 %v1237, %v1238
    %v1241 = vperm.slane %v1193, 0
    %v1242 = vadd.f32 %v1239, %v1241
    %v1243 = vadd.f32 %v1240, %v1241
    %v1244 = vpack.c.bf16 %v1243, %v1242
    %v1245 = vld [vmem:[%s1 + $0xe] sm:$0x1]
    %v1246 = vperm.slane %v1245, 0
    %v1247 = vunpack.c.h.b16 %v806
    %v1248 = vunpack.c.h.b16 %v807
    %v1249 = vunpack.c.h.b16 %v808
    %v1250 = vunpack.c.h.b16 %v809
    %v1251 = vpack.c.b16 %v1248, %v1247
    %v1252 = vpack.c.b16 %v1250, %v1249
    %v1256 = vsel %vm128, %v1244, 0
    %1258 = vmatpush.bf16.msra.mxu0 0
    %1259 = vmatpush.bf16.msra.mxu0 0
    %1260 = vmatpush.bf16.msra.mxu0 0
    %1261 = vmatpush.bf16.msra.mxu0 0
    %1262 = vmatpush.bf16.msra.mxu0 0
    %1263 = vmatpush.bf16.msra.mxu0 0
    %1264 = vmatpush.bf16.msra.mxu0 %v1252
    %1265 = vmatpush.bf16.msra.mxu0 %v1251
    %1266 = vmatmul.bf16.gmra.mxu0 %v1256
    %v1267 = vpop.f32.mrf.mxu0
    %v1268 = vadd.f32 %v1246, %v1267
    %v1269 = vpop.f32.mrf.mxu0
    %v1270 = vadd.f32 %v1246, %v1269
    %1271 = vdwg.mxu0
    %v1272 = vmul.f32 %v1268, %v1268
    %v1273 = vmul.f32 %v1270, %v1270
    %v1274 = vmul.f32 %v1268, %v1272
    %v1275 = vmul.f32 %v1270, %v1273
    %v1276 = vmul.f32 %v1274, 0.044715
    %v1277 = vmul.f32 %v1275, 0.044715
    %v1278 = vadd.f32 %v1268, %v1276
    %v1279 = vadd.f32 %v1270, %v1277
    %v1280 = vmul.f32 %v1278, 0.7978846
    %v1281 = vmul.f32 %v1279, 0.7978846
    %v1282 = vtanh.pop %v1280
    %v1283 = vtanh.pop %v1281
    %v1284 = vadd.f32 %v1282, 1.0
    %v1285 = vadd.f32 %v1283, 1.0
    %v1286 = vmul.f32 %v1284, 0.5
    %v1287 = vmul.f32 %v1285, 0.5
    %v1288 = vmul.f32 %v1268, %v1286
    %v1289 = vmul.f32 %v1270, %v1287
    %v1290 = vpack.c.bf16 %v1289, %v1288
    %v1291 = vld [vmem:[%s2 + $0xe0] sm:$0xf]
    %v1292 = vld [vmem:[%s2 + $0xe8] sm:$0xf]
    %v1293 = vld [vmem:[%s2 + $0xf0] sm:$0xf]
    %v1294 = vld [vmem:[%s2 + $0xf8] sm:$0xf]
    %v1295 = vld [vmem:[%s2 + $0x100] sm:$0xf]
    %v1296 = vld [vmem:[%s2 + $0x108] sm:$0xf]
    %v1297 = vld [vmem:[%s2 + $0x110] sm:$0xf]
    %v1298 = vld [vmem:[%s2 + $0x118] sm:$0xf]
    %v1299 = vld [vmem:[%s1 + $0xf] sm:$0x1]
    %v1300 = vperm.slane %v1299, 0
    %v1309 = vunpack.c.l.b16 %v1291
    %v1310 = vunpack.c.l.b16 %v1292
    %v1311 = vunpack.c.l.b16 %v1293
    %v1312 = vunpack.c.l.b16 %v1294
    %v1313 = vunpack.c.l.b16 %v1295
    %v1314 = vunpack.c.l.b16 %v1296
    %v1315 = vunpack.c.l.b16 %v1297
    %v1316 = vunpack.c.l.b16 %v1298
    %v1317 = vpack.c.b16 %v1310, %v1309
    %v1318 = vpack.c.b16 %v1312, %v1311
    %v1319 = vpack.c.b16 %v1314, %v1313
    %v1320 = vpack.c.b16 %v1316, %v1315
    %v1326 = vsel %vm106, %v1290, 0
    %1328 = vmatpush.bf16.msra.mxu0 0
    %1329 = vmatpush.bf16.msra.mxu0 0
    %1330 = vmatpush.bf16.msra.mxu0 0
    %1331 = vmatpush.bf16.msra.mxu0 0
    %1332 = vmatpush.bf16.msra.mxu0 %v1320
    %1333 = vmatpush.bf16.msra.mxu0 %v1319
    %1334 = vmatpush.bf16.msra.mxu0 %v1318
    %1335 = vmatpush.bf16.msra.mxu0 %v1317
    %1336 = vmatmul.bf16.gmra.mxu0 %v1326
    %v1337 = vpop.f32.mrf.mxu0
    %v1338 = vadd.f32 %v1300, %v1337
    %v1339 = vpop.f32.mrf.mxu0
    %v1340 = vadd.f32 %v1300, %v1339
    %1341 = vdwg.mxu0
    %v1342 = vadd.f32 %v1242, %v1338
    %v1343 = vadd.f32 %v1243, %v1340
    %v1344 = vld [vmem:[%s1 + $0x10] sm:$0x1]
    %v1345 = vld [vmem:[%s1 + $0x11] sm:$0x1]
    %v1346 = vsel %vm128, %v1342, 0.0
    %1347 = vadd.xlane.f32.xlu0 %v1346
    %v1348 = vpop.xlane.xlu0 %1347
    %v1349 = vsel %vm128, %v1343, 0.0
    %1350 = vadd.xlane.f32.xlu0 %v1349
    %v1351 = vpop.xlane.xlu0 %1350
    %v1352 = vmul.f32 %v1348, %v141
    %v1353 = vmul.f32 %v1351, %v141
    %v1354 = vsub.f32 %v1342, %v1352
    %v1355 = vsub.f32 %v1343, %v1353
    %v1356 = vmul.f32 %v1354, %v1354
    %v1357 = vmul.f32 %v1355, %v1355
    %v1358 = vsel %vm128, %v1356, 0.0
    %1359 = vadd.xlane.f32.xlu0 %v1358
    %v1360 = vpop.xlane.xlu0 %1359
    %v1361 = vsel %vm128, %v1357, 0.0
    %1362 = vadd.xlane.f32.xlu0 %v1361
    %v1363 = vpop.xlane.xlu0 %1362
    %v1364 = vmul.f32 %v1360, %v141
    %v1365 = vmul.f32 %v1363, %v141
    %v1366 = vadd.f32 %v1364, 1e-12
    %v1367 = vadd.f32 %v1365, 1e-12
    %v1368 = vrsqrt.pop %v1366
    %v1369 = vmul.f32 %v1368, %v1366
    %v1370 = vmul.f32 %v1369, %v1368
    %v1371 = vmul.f32 0.5, %v1370
    %v1372 = vsub.f32 1.5, %v1371
    %v1373 = vmul.f32 %v1368, %v1372
    %vm1374 = vweird.f32 %v1366
    %vm1375 = vweird.f32 %v1368
    %vm1376 = vmor %vm1374, %vm1375
    %v1377 = vsel %vm1376, %v1368, %v1373
    %v1378 = vrsqrt.pop %v1367
    %v1379 = vmul.f32 %v1378, %v1367
    %v1380 = vmul.f32 %v1379, %v1378
    %v1381 = vmul.f32 0.5, %v1380
    %v1382 = vsub.f32 1.5, %v1381
    %v1383 = vmul.f32 %v1378, %v1382
    %vm1384 = vweird.f32 %v1367
    %vm1385 = vweird.f32 %v1378
    %vm1386 = vmor %vm1384, %vm1385
    %v1387 = vsel %vm1386, %v1378, %v1383
    %v1388 = vmul.f32 %v1354, %v1377
    %v1389 = vmul.f32 %v1355, %v1387
    %v1390 = vperm.slane %v1344, 0
    %v1391 = vmul.f32 %v1388, %v1390
    %v1392 = vmul.f32 %v1389, %v1390
    %v1393 = vperm.slane %v1345, 0
    %v1394 = vadd.f32 %v1391, %v1393
    %v1395 = vadd.f32 %v1392, %v1393
    %v1396 = vld [vmem:[%s2 + $0x120] sm:$0xff]
    %v1397 = vld [vmem:[%s2 + $0x128] sm:$0xff]
    %v1398 = vld [vmem:[%s2 + $0x130] sm:$0xff]
    %v1399 = vld [vmem:[%s2 + $0x138] sm:$0xff]
    %v1400 = vpack.c.bf16 %v1394, %v1394
    %v1401 = vpack.c.bf16 %v1395, %v1395
    %v1402 = vld [vmem:[%s1 + $0x12] sm:$0x1]
    %v1403 = vperm.slane %v1402, 0
    %v1406 = vunpack.c.l.b16 %v1400
    %v1407 = vunpack.c.l.b16 %v1401
    %v1408 = vrot.slane %v1407, 7
    %vm1409 = vcmask 1041409
    %v1410 = vsel %vm1409, %v1408, %v1406
    %v1411 = vpack.c.b16 %v1410, %v1410
    %v1416 = vunpack.c.h.b16 %v1396
    %v1417 = vunpack.c.h.b16 %v1397
    %v1418 = vunpack.c.h.b16 %v1398
    %v1419 = vunpack.c.h.b16 %v1399
    %v1420 = vpack.c.b16 %v1417, %v1416
    %v1421 = vpack.c.b16 %v1419, %v1418
    %v1425 = vsel %vm128, %v1411, 0
    %1427 = vmatpush.bf16.msra.mxu0 0
    %1428 = vmatpush.bf16.msra.mxu0 0
    %1429 = vmatpush.bf16.msra.mxu0 0
    %1430 = vmatpush.bf16.msra.mxu0 0
    %1431 = vmatpush.bf16.msra.mxu0 0
    %1432 = vmatpush.bf16.msra.mxu0 0
    %1433 = vmatpush.bf16.msra.mxu0 %v1421
    %1434 = vmatpush.bf16.msra.mxu0 %v1420
    %1435 = vmatmul.bf16.gmra.mxu0 %v1425
    %v1436 = vpop.f32.mrf.mxu0
    %v1437 = vadd.f32 %v1403, %v1436
    %v1438 = vpop.f32.mrf.mxu0
    %1439 = vdwg.mxu0
    %v1440 = vtanh.pop %v1437
    %v1441 = vpack.c.bf16 %v1440, %v1440
    %v1442 = vld [vmem:[%s1 + $0x13] sm:$0x1]
    %v1443 = vperm.slane %v1442, 0
    %v1444 = vunpack.c.l.b16 %v1396
    %v1445 = vunpack.c.l.b16 %v1397
    %v1446 = vunpack.c.l.b16 %v1398
    %v1447 = vunpack.c.l.b16 %v1399
    %v1448 = vpack.c.b16 %v1445, %v1444
    %v1449 = vpack.c.b16 %v1447, %v1446
    %v1453 = vsel %vm128, %v1441, 0
    %1455 = vmatpush.bf16.msra.mxu0 0
    %1456 = vmatpush.bf16.msra.mxu0 0
    %1457 = vmatpush.bf16.msra.mxu0 0
    %1458 = vmatpush.bf16.msra.mxu0 0
    %1459 = vmatpush.bf16.msra.mxu0 0
    %1460 = vmatpush.bf16.msra.mxu0 0
    %1461 = vmatpush.bf16.msra.mxu0 %v1449
    %1462 = vmatpush.bf16.msra.mxu0 %v1448
    %1463 = vmatmul.bf16.gmra.mxu0 %v1453
    %v1464 = vpop.f32.mrf.mxu0
    %v1465 = vadd.f32 %v1443, %v1464
    %v1466 = vpop.f32.mrf.mxu0
    %1467 = vdwg.mxu0
    %1468 = vst [vmem:[#allocation2] sm:$0x3] %v1465
    %1469 = vset.pattern.permute.xlu0 2
    %1470 = vperm.xlu0 %1469, %v23
    %v1471 = vpop.permute.xlu0 %1470
    %vm1472 = vcmp.eq.s32.totalorder %v26, %v1471
    %v1473 = vsel %vm1472, 1, 0
    %v1474 = vcvt.s32.f32 %v1473
    %vm1475 = vcmp.lt.s32.totalorder %v26, 2
    %v1476 = vsel %vm1475, 0.0, -1e+30
    %v1477 = vadd.f32 %v1465, %v1476
    %v1478 = vsel %vm191, %v1477, -inf
    %1479 = vmax.xlane.f32.xlu0 %v1478
    %v1480 = vpop.xlane.xlu0 %1479
    %v1481 = vsub.f32 %v1477, %v1480
    %v1482 = vmul.f32 %v1481, 1.442695
    %v1483 = vpow.pop %v1482
    %v1484 = vsel %vm191, %v1483, 0.0
    %1485 = vadd.xlane.f32.xlu0 %v1484
    %v1486 = vpop.xlane.xlu0 %1485
    %v1487 = vlog2.pop %v1486
    %v1488 = vmul.f32 %v1487, 0.6931472
    %v1489 = vadd.f32 %v1480, %v1488
    %v1490 = vmul.f32 %v1474, %v1465
    %v1491 = vsel %vm191, %v1490, 0.0
    %1492 = vadd.xlane.f32.xlu0 %v1491
    %v1493 = vpop.xlane.xlu0 %1492
    %v1494 = vsub.f32 %v1489, %v1493
    %vm1495 = vcmask 1024
    %v1496 = vsel %vm1495, %v1494, 0.0
    %1497 = vadd.xlane.f32.xlu0 %v1496
    %v1498 = vpop.xlane.xlu0 %1497
    %v1499 = vrot.slane %v1498, 4
    %v1500 = vadd.f32 %v1498, %v1499
    %v1501 = vrot.slane %v1500, 2
    %v1502 = vadd.f32 %v1500, %v1501
    %v1503 = vrot.slane %v1502, 1
    %v1504 = vadd.f32 %v1502, %v1503
    %s1505 = vtos %v1504
    %v1506 = vrcp.pop 2.0
    %v1507 = vmul.f32 2.0, %v1506
    %v1508 = vsub.f32 1.0, %v1507
    %v1509 = vmul.f32 %v1506, %v1508
    %v1510 = vadd.f32 %v1506, %v1509
    %vm1511 = vweird.f32 %v1506
    %v1512 = vsel %vm1511, %v1506, %v1510
    %s1513 = vtos %v1512
    %s1514 = smul.f32 %s1505, %s1513
    %s1515 = scalar_lea.smem [#allocation5], 0
    %1516 = sst [smem:[%s1515]] %s1514
    // Predicated region
    $region14: #{tpu_custom_call.1} parent=1 // pred_check
      _
    $region15: #{tpu_custom_call.1} parent=1 // pred_check_branch
      %1518 = sbr.rel (0) target = $region17
    $region16: #{tpu_custom_call.1} parent=1 // pred_region
      %1520 = vsyncadd [#allocation3], 0
      %s1522 = sshll.u32 [#allocation2], 4
      %s1523 = int_to_ptr.vmem [resolvable:$true] %s1522
      %s1524 = sshll.u32 %s3, 4
      %s1525 = int_to_ptr.hbm [resolvable:$true] %s1524
      %1527 = dma.vmem_to_hbm [thread:$0]  %s1523, 32, %s1525, [#allocation3]
    $region17: #{tpu_custom_call.1} parent=1 // pred_fallthru
      _
    // Predicated region
    $region18: #{tpu_custom_call.1} parent=1 // pred_check
      _
    $region19: #{tpu_custom_call.1} parent=1 // pred_check_branch
      %1529 = sbr.rel (0) target = $region21
    $region20: #{tpu_custom_call.1} parent=1 // pred_region
      %1531 = vsyncadd [#allocation4], 0
      %s1533 = sshll.u32 %s4, 4
      %s1534 = int_to_ptr.hbm [resolvable:$true] %s1533
      %1536 = dma.smem_to_hbm [#allocation5], 16, %s1534, [#allocation4]
    $region21: #{tpu_custom_call.1} parent=1 // pred_fallthru
      _
    // Predicated region
    $region22: #{tpu_custom_call.1} parent=1 // pred_check
      _
    $region23: #{tpu_custom_call.1} parent=1 // pred_check_branch
      %1538 = sbr.rel (0) target = $region25
    $region24: #{tpu_custom_call.1} parent=1 // pred_region
      %1540 = dma.done [#allocation3], 32
    $region25: #{tpu_custom_call.1} parent=1 // pred_fallthru
      _
    // Predicated region
    $region26: #{tpu_custom_call.1} parent=1 // pred_check
      _
    $region27: #{tpu_custom_call.1} parent=1 // pred_check_branch
      %1542 = sbr.rel (0) target = $region29
    $region28: #{tpu_custom_call.1} parent=1 // pred_region
      %1544 = dma.done [#allocation4], 16
    $region29: #{tpu_custom_call.1} parent=1 // pred_fallthru
      _
    %1545 = sfence
    %1546 = vsyncpa [#allocation3], 1
    %1547 = vsyncpa [#allocation4], 1

</llo_original>
